<compile_context>
chip_gen: v6e
topology: v6e:2x2x1
jax: 0.10.0
libtpu: 0.0.40
codegen_flags: <defaults>
</compile_context>

<pallas_src>
import math

import jax
import jax.numpy as jnp
from jax.experimental import pallas as pl
from jax.experimental.pallas import tpu as pltpu


def make_pe_table(max_len, d_model):
    """Replicates the PyTorch buffer construction exactly (including the
    arange(0, 2, d_model) div_term, which evaluates to [1.0] for d_model >= 2)."""
    div_term = jnp.exp(jnp.arange(0, 2, d_model, dtype=jnp.float32)
                       * (-math.log(10000.0) / d_model))            # shape (1,)
    position = jnp.arange(0, max_len, dtype=jnp.float32)[:, None]
    pe = jnp.zeros((max_len, d_model), jnp.float32)
    pe = pe.at[:, 0::2].set(jnp.sin(position * div_term))
    pe = pe.at[:, 1::2].set(jnp.cos(position * div_term))
    return pe


def _make_kernel(N, C, H, W, lane_dense_out):
    f32 = jnp.float32

    def kernel(x_ref, peh_ref, pew_ref,
               w1h_ref, b1h_ref, w2h_ref, b2h_ref,
               w1w_ref, b1w_ref, w2w_ref, b2w_ref,
               out_ref):
        # ---- expand compact pe tables to the lane-dense (C, H*W) compute layout,
        #      entirely in VMEM (exact: lane-broadcast + concatenate, no HBM) ----
        peh = peh_ref[...].astype(f32)                         # (C, H)  == pe_h[h, c].T
        pew = pew_ref[...].astype(f32)                         # (C, W)  == pe_w[w, c].T
        # peh_exp[c, h*W + w] = pe_h[h, c]   (each column repeated W times)
        peh_exp = jnp.concatenate(
            [jnp.broadcast_to(peh[:, h:h + 1], (C, W)) for h in range(H)], axis=1)
        # pew_exp[c, h*W + w] = pe_w[w, c]   (compact table tiled H times along lanes)
        pew_exp = jnp.concatenate([pew] * H, axis=1)           # (C, H*W)

        def gate(g, w1_ref, b1_ref, w2_ref, b2_ref):
            # nn.Linear with native (out, in) weights applied to a column vector:
            #   y = W @ g + b   (rides on the otherwise-idle MXU)
            z1 = jnp.dot(w1_ref[...].astype(f32), g,
                         preferred_element_type=f32) + b1_ref[...].astype(f32)
            h1 = jnp.maximum(z1, 0.0)                                      # ReLU
            z2 = jnp.dot(w2_ref[...].astype(f32), h1,
                         preferred_element_type=f32) + b2_ref[...].astype(f32)
            return 1.0 / (1.0 + jnp.exp(-z2))                              # Sigmoid, (C, 1)

        for n in range(N):                                     # static unroll, N is small
            xb = x_ref[n].astype(f32)                          # (C, H*W) NCHW slice, HW on lanes
            g = jnp.mean(xb, axis=1, keepdims=True)            # (C, 1)   fused AdaptiveAvgPool2d
            alpha = gate(g, w1h_ref, b1h_ref, w2h_ref, b2h_ref)
            beta = gate(g, w1w_ref, b1w_ref, w2w_ref, b2w_ref)
            s = xb + alpha * peh_exp + beta * pew_exp          # (C, H*W) lane-dense compute
            if lane_dense_out:
                # (C, H*W) -> (H, W*C):  out[h, w*C + c] = s[c, h*W + w]  (full 128-lane stores)
                out_ref[n] = pltpu.einshape("c(hw)->h(wc)", s, h=H, w=W)
            else:
                # known-good fallback: C-minor (masked) stores
                out_ref[n] = s.T                               # (H*W, C)

    return kernel


def positional_encoder_2d(x_nchw, params, pe_h_full, pe_w_full, *, lane_dense_out=True):
    """Pallas forward.  `params` uses native PyTorch nn.Linear layout:
    (w1h, b1h, w2h, b2h, w1w, b1w, w2w, b2w), weights (out, in), biases (out,)."""
    N, C, H, W = x_nchw.shape
    HW = H * W
    assert H <= pe_h_full.shape[0] and W <= pe_w_full.shape[0], \
        "spatial size exceeds positional table max_len"
    w1h, b1h, w2h, b2h, w1w, b1w, w2w, b2w = params

    # Compact register_buffer slices in the kernel's (C, len) layout (tiny; in a real
    # module these would be precomputed once at init).
    peh_cH = pe_h_full[:H].T                                   # (C, H)
    pew_cW = pe_w_full[:W].T                                   # (C, W)

    # Free reshape of the NCHW tensor: no XLA transpose, no dtype copy.
    x_flat = x_nchw.reshape(N, C, HW)

    col = lambda b: b.reshape(C, 1)                            # biases as column vectors

    kernel = _make_kernel(N, C, H, W, lane_dense_out)
    out_shape = (N, H, W * C) if lane_dense_out else (N, HW, C)

    vmem = pl.BlockSpec(memory_space=pltpu.MemorySpace.VMEM)   # whole array in VMEM, single step
    out = pl.pallas_call(
        kernel,
        out_shape=jax.ShapeDtypeStruct(out_shape, jnp.float32),
        in_specs=[vmem] * 11,
        out_specs=vmem,
    )(x_flat, peh_cH, pew_cW,
      w1h, col(b1h), w2h, col(b2h),
      w1w, col(b1w), w2w, col(b2w))

    if lane_dense_out:
        out = out.reshape(N, HW, C)                            # free row-major reinterpretation
    return out


def ref_forward(x_nchw, params, pe_h_full, pe_w_full):
    """Pure-JAX reference mirroring the PyTorch forward (PyTorch weight layout)."""
    N, C, H, W = x_nchw.shape
    w1h, b1h, w2h, b2h, w1w, b1w, w2w, b2w = params
    pe_h = pe_h_full[:H][None, :, None, :]                     # (1, H, 1, C)
    pe_w = pe_w_full[:W][None, None, :, :]                     # (1, 1, W, C)
    g = jnp.mean(x_nchw.astype(jnp.float32), axis=(2, 3))      # (N, C)

    hp = jax.lax.Precision.HIGHEST
    def mlp(v, w1, b1, w2, b2):
        hid = jnp.maximum(jnp.dot(v, w1.T, precision=hp) + b1, 0.0)
        return jax.nn.sigmoid(jnp.dot(hid, w2.T, precision=hp) + b2)

    alpha = mlp(g, w1h, b1h, w2h, b2h)[:, None, None, :]
    beta = mlp(g, w1w, b1w, w2w, b2w)[:, None, None, :]
    pe = alpha * pe_h + beta * pe_w
    x_nhwc = jnp.transpose(x_nchw, (0, 2, 3, 1)).astype(jnp.float32)
    return (x_nhwc + pe).reshape(N, -1, C)


if __name__ == "__main__":
    # small shapes: batch=2, d_model=C=32, H=W=16
    N, C, H, W = 2, 32, 16, 16
    MAX_LEN = 5000

    key = jax.random.PRNGKey(0)
    kx, *kp = jax.random.split(key, 9)

    # deterministic synthetic parameters in native PyTorch nn.Linear layout:
    #   weight (out, in), bias (out,)   ->   y = v @ W.T + b
    def wmat(k):
        return 0.1 * jax.random.normal(k, (C, C), jnp.float32)

    def bvec(k):
        return 0.05 * jax.random.normal(k, (C,), jnp.float32)

    params = (wmat(kp[0]), bvec(kp[1]), wmat(kp[2]), bvec(kp[3]),   # transform_h
              wmat(kp[4]), bvec(kp[5]), wmat(kp[6]), bvec(kp[7]))   # transform_w

    pe_h_full = make_pe_table(MAX_LEN, C)
    pe_w_full = make_pe_table(MAX_LEN, C)

    x = jax.random.normal(kx, (N, C, H, W), jnp.float32)            # NCHW like PyTorch

    ref = ref_forward(x, params, pe_h_full, pe_w_full)

    # Tolerance covers MXU matmul-pass / EUP transcendental differences between the
    # in-kernel gate MLP and the XLA reference; real layout/indexing bugs give O(1) errors.
    def close(a, b):
        return bool(jnp.allclose(a, b, atol=1e-3, rtol=1e-3))

    out = None
    try:
        cand = jax.block_until_ready(
            positional_encoder_2d(x, params, pe_h_full, pe_w_full, lane_dense_out=True))
        if cand.shape == (N, H * W, C) and close(cand, ref):
            out = cand
    except Exception:
        out = None

    if out is None:
        # TODO(synk): lane-dense (H, W*C) einshape relayout unavailable on this toolchain;
        # using the C-minor store fallback (correct; slightly more store-slot pressure).
        out = jax.block_until_ready(
            positional_encoder_2d(x, params, pe_h_full, pe_w_full, lane_dense_out=False))
        assert close(out, ref), "mismatch vs reference"

    assert out.shape == (N, H * W, C), out.shape
    print("KERNEL_OK")
</pallas_src>

<mosaic_0001>
module attributes {stable_mosaic.version = 11 : i64} {
  func.func @kernel(%arg0: memref<2x32x256xf32, #tpu.memory_space<vmem>>, %arg1: memref<32x16xf32, #tpu.memory_space<vmem>>, %arg2: memref<32x16xf32, #tpu.memory_space<vmem>>, %arg3: memref<32x32xf32, #tpu.memory_space<vmem>>, %arg4: memref<32x1xf32, #tpu.memory_space<vmem>>, %arg5: memref<32x32xf32, #tpu.memory_space<vmem>>, %arg6: memref<32x1xf32, #tpu.memory_space<vmem>>, %arg7: memref<32x32xf32, #tpu.memory_space<vmem>>, %arg8: memref<32x1xf32, #tpu.memory_space<vmem>>, %arg9: memref<32x32xf32, #tpu.memory_space<vmem>>, %arg10: memref<32x1xf32, #tpu.memory_space<vmem>>, %arg11: memref<2x256x32xf32, #tpu.memory_space<vmem>>) attributes {dimension_semantics = [], scalar_prefetch = 0 : i64, scratch_operands = 0 : i64, tpu.core_type = #tpu.core_type<tc>} {
    %c0 = arith.constant 0 : index
    %c0_0 = arith.constant 0 : index
    %0 = vector.load %arg1[%c0, %c0_0] : memref<32x16xf32, #tpu.memory_space<vmem>>, vector<32x16xf32>
    %c0_1 = arith.constant 0 : index
    %c0_2 = arith.constant 0 : index
    %1 = vector.load %arg2[%c0_1, %c0_2] : memref<32x16xf32, #tpu.memory_space<vmem>>, vector<32x16xf32>
    %2 = vector.extract_strided_slice %0 {offsets = [0, 0], sizes = [32, 1], strides = [1, 1]} : vector<32x16xf32> to vector<32x1xf32>
    %3 = vector.shape_cast %2 : vector<32x1xf32> to vector<32x1xf32>
    %4 = vector.broadcast %3 : vector<32x1xf32> to vector<32x16xf32>
    %5 = vector.extract_strided_slice %0 {offsets = [0, 1], sizes = [32, 1], strides = [1, 1]} : vector<32x16xf32> to vector<32x1xf32>
    %6 = vector.shape_cast %5 : vector<32x1xf32> to vector<32x1xf32>
    %7 = vector.broadcast %6 : vector<32x1xf32> to vector<32x16xf32>
    %8 = vector.extract_strided_slice %0 {offsets = [0, 2], sizes = [32, 1], strides = [1, 1]} : vector<32x16xf32> to vector<32x1xf32>
    %9 = vector.shape_cast %8 : vector<32x1xf32> to vector<32x1xf32>
    %10 = vector.broadcast %9 : vector<32x1xf32> to vector<32x16xf32>
    %11 = vector.extract_strided_slice %0 {offsets = [0, 3], sizes = [32, 1], strides = [1, 1]} : vector<32x16xf32> to vector<32x1xf32>
    %12 = vector.shape_cast %11 : vector<32x1xf32> to vector<32x1xf32>
    %13 = vector.broadcast %12 : vector<32x1xf32> to vector<32x16xf32>
    %14 = vector.extract_strided_slice %0 {offsets = [0, 4], sizes = [32, 1], strides = [1, 1]} : vector<32x16xf32> to vector<32x1xf32>
    %15 = vector.shape_cast %14 : vector<32x1xf32> to vector<32x1xf32>
    %16 = vector.broadcast %15 : vector<32x1xf32> to vector<32x16xf32>
    %17 = vector.extract_strided_slice %0 {offsets = [0, 5], sizes = [32, 1], strides = [1, 1]} : vector<32x16xf32> to vector<32x1xf32>
    %18 = vector.shape_cast %17 : vector<32x1xf32> to vector<32x1xf32>
    %19 = vector.broadcast %18 : vector<32x1xf32> to vector<32x16xf32>
    %20 = vector.extract_strided_slice %0 {offsets = [0, 6], sizes = [32, 1], strides = [1, 1]} : vector<32x16xf32> to vector<32x1xf32>
    %21 = vector.shape_cast %20 : vector<32x1xf32> to vector<32x1xf32>
    %22 = vector.broadcast %21 : vector<32x1xf32> to vector<32x16xf32>
    %23 = vector.extract_strided_slice %0 {offsets = [0, 7], sizes = [32, 1], strides = [1, 1]} : vector<32x16xf32> to vector<32x1xf32>
    %24 = vector.shape_cast %23 : vector<32x1xf32> to vector<32x1xf32>
    %25 = vector.broadcast %24 : vector<32x1xf32> to vector<32x16xf32>
    %26 = vector.extract_strided_slice %0 {offsets = [0, 8], sizes = [32, 1], strides = [1, 1]} : vector<32x16xf32> to vector<32x1xf32>
    %27 = vector.shape_cast %26 : vector<32x1xf32> to vector<32x1xf32>
    %28 = vector.broadcast %27 : vector<32x1xf32> to vector<32x16xf32>
    %29 = vector.extract_strided_slice %0 {offsets = [0, 9], sizes = [32, 1], strides = [1, 1]} : vector<32x16xf32> to vector<32x1xf32>
    %30 = vector.shape_cast %29 : vector<32x1xf32> to vector<32x1xf32>
    %31 = vector.broadcast %30 : vector<32x1xf32> to vector<32x16xf32>
    %32 = vector.extract_strided_slice %0 {offsets = [0, 10], sizes = [32, 1], strides = [1, 1]} : vector<32x16xf32> to vector<32x1xf32>
    %33 = vector.shape_cast %32 : vector<32x1xf32> to vector<32x1xf32>
    %34 = vector.broadcast %33 : vector<32x1xf32> to vector<32x16xf32>
    %35 = vector.extract_strided_slice %0 {offsets = [0, 11], sizes = [32, 1], strides = [1, 1]} : vector<32x16xf32> to vector<32x1xf32>
    %36 = vector.shape_cast %35 : vector<32x1xf32> to vector<32x1xf32>
    %37 = vector.broadcast %36 : vector<32x1xf32> to vector<32x16xf32>
    %38 = vector.extract_strided_slice %0 {offsets = [0, 12], sizes = [32, 1], strides = [1, 1]} : vector<32x16xf32> to vector<32x1xf32>
    %39 = vector.shape_cast %38 : vector<32x1xf32> to vector<32x1xf32>
    %40 = vector.broadcast %39 : vector<32x1xf32> to vector<32x16xf32>
    %41 = vector.extract_strided_slice %0 {offsets = [0, 13], sizes = [32, 1], strides = [1, 1]} : vector<32x16xf32> to vector<32x1xf32>
    %42 = vector.shape_cast %41 : vector<32x1xf32> to vector<32x1xf32>
    %43 = vector.broadcast %42 : vector<32x1xf32> to vector<32x16xf32>
    %44 = vector.extract_strided_slice %0 {offsets = [0, 14], sizes = [32, 1], strides = [1, 1]} : vector<32x16xf32> to vector<32x1xf32>
    %45 = vector.shape_cast %44 : vector<32x1xf32> to vector<32x1xf32>
    %46 = vector.broadcast %45 : vector<32x1xf32> to vector<32x16xf32>
    %47 = vector.extract_strided_slice %0 {offsets = [0, 15], sizes = [32, 1], strides = [1, 1]} : vector<32x16xf32> to vector<32x1xf32>
    %48 = vector.shape_cast %47 : vector<32x1xf32> to vector<32x1xf32>
    %49 = vector.broadcast %48 : vector<32x1xf32> to vector<32x16xf32>
    %50 = tpu.concatenate %4, %7, %10, %13, %16, %19, %22, %25, %28, %31, %34, %37, %40, %43, %46, %49 in 1 : vector<32x16xf32>, vector<32x16xf32>, vector<32x16xf32>, vector<32x16xf32>, vector<32x16xf32>, vector<32x16xf32>, vector<32x16xf32>, vector<32x16xf32>, vector<32x16xf32>, vector<32x16xf32>, vector<32x16xf32>, vector<32x16xf32>, vector<32x16xf32>, vector<32x16xf32>, vector<32x16xf32>, vector<32x16xf32> -> vector<32x256xf32>
    %51 = tpu.concatenate %1, %1, %1, %1, %1, %1, %1, %1, %1, %1, %1, %1, %1, %1, %1, %1 in 1 : vector<32x16xf32>, vector<32x16xf32>, vector<32x16xf32>, vector<32x16xf32>, vector<32x16xf32>, vector<32x16xf32>, vector<32x16xf32>, vector<32x16xf32>, vector<32x16xf32>, vector<32x16xf32>, vector<32x16xf32>, vector<32x16xf32>, vector<32x16xf32>, vector<32x16xf32>, vector<32x16xf32>, vector<32x16xf32> -> vector<32x256xf32>
    %c0_3 = arith.constant 0 : index
    %c0_4 = arith.constant 0 : index
    %c0_5 = arith.constant 0 : index
    %52 = vector.load %arg0[%c0_3, %c0_4, %c0_5] : memref<2x32x256xf32, #tpu.memory_space<vmem>>, vector<1x32x256xf32>
    %53 = vector.shape_cast %52 : vector<1x32x256xf32> to vector<32x256xf32>
    %cst = arith.constant dense<0.000000e+00> : vector<32xf32>
    %54 = vector.multi_reduction <add>, %53, %cst [1] : vector<32x256xf32> to vector<32xf32>
    %55 = vector.shape_cast %54 : vector<32xf32> to vector<32x1xf32>
    %cst_6 = arith.constant 2.560000e+02 : f32
    %56 = vector.broadcast %cst_6 : f32 to vector<32x1xf32>
    %57 = arith.divf %55, %56 : vector<32x1xf32>
    %c0_7 = arith.constant 0 : index
    %c0_8 = arith.constant 0 : index
    %58 = vector.load %arg3[%c0_7, %c0_8] : memref<32x32xf32, #tpu.memory_space<vmem>>, vector<32x32xf32>
    %cst_9 = arith.constant dense<0.000000e+00> : vector<32x1xf32>
    %59 = tpu.matmul %58, %57, %cst_9 {dimension_numbers = #tpu.dot_dimension_numbers<[1], [0], [0], [1], [0, 0, 1, 1], [], []>} : vector<32x32xf32>, vector<32x1xf32>, vector<32x1xf32> -> vector<32x1xf32>
    %c0_10 = arith.constant 0 : index
    %c0_11 = arith.constant 0 : index
    %60 = vector.load %arg4[%c0_10, %c0_11] : memref<32x1xf32, #tpu.memory_space<vmem>>, vector<32x1xf32>
    %61 = arith.addf %59, %60 : vector<32x1xf32>
    %cst_12 = arith.constant 0.000000e+00 : f32
    %62 = vector.broadcast %cst_12 : f32 to vector<32x1xf32>
    %63 = arith.maximumf %61, %62 : vector<32x1xf32>
    %c0_13 = arith.constant 0 : index
    %c0_14 = arith.constant 0 : index
    %64 = vector.load %arg5[%c0_13, %c0_14] : memref<32x32xf32, #tpu.memory_space<vmem>>, vector<32x32xf32>
    %cst_15 = arith.constant dense<0.000000e+00> : vector<32x1xf32>
    %65 = tpu.matmul %64, %63, %cst_15 {dimension_numbers = #tpu.dot_dimension_numbers<[1], [0], [0], [1], [0, 0, 1, 1], [], []>} : vector<32x32xf32>, vector<32x1xf32>, vector<32x1xf32> -> vector<32x1xf32>
    %c0_16 = arith.constant 0 : index
    %c0_17 = arith.constant 0 : index
    %66 = vector.load %arg6[%c0_16, %c0_17] : memref<32x1xf32, #tpu.memory_space<vmem>>, vector<32x1xf32>
    %67 = arith.addf %65, %66 : vector<32x1xf32>
    %cst_18 = arith.constant 0.000000e+00 : f32
    %68 = vector.broadcast %cst_18 : f32 to vector<32x1xf32>
    %69 = arith.subf %68, %67 : vector<32x1xf32>
    %70 = math.exp %69 : vector<32x1xf32>
    %cst_19 = arith.constant 1.000000e+00 : f32
    %71 = vector.broadcast %cst_19 : f32 to vector<32x1xf32>
    %72 = arith.addf %71, %70 : vector<32x1xf32>
    %cst_20 = arith.constant 1.000000e+00 : f32
    %73 = vector.broadcast %cst_20 : f32 to vector<32x1xf32>
    %74 = arith.divf %73, %72 : vector<32x1xf32>
    %c0_21 = arith.constant 0 : index
    %c0_22 = arith.constant 0 : index
    %75 = vector.load %arg7[%c0_21, %c0_22] : memref<32x32xf32, #tpu.memory_space<vmem>>, vector<32x32xf32>
    %cst_23 = arith.constant dense<0.000000e+00> : vector<32x1xf32>
    %76 = tpu.matmul %75, %57, %cst_23 {dimension_numbers = #tpu.dot_dimension_numbers<[1], [0], [0], [1], [0, 0, 1, 1], [], []>} : vector<32x32xf32>, vector<32x1xf32>, vector<32x1xf32> -> vector<32x1xf32>
    %c0_24 = arith.constant 0 : index
    %c0_25 = arith.constant 0 : index
    %77 = vector.load %arg8[%c0_24, %c0_25] : memref<32x1xf32, #tpu.memory_space<vmem>>, vector<32x1xf32>
    %78 = arith.addf %76, %77 : vector<32x1xf32>
    %cst_26 = arith.constant 0.000000e+00 : f32
    %79 = vector.broadcast %cst_26 : f32 to vector<32x1xf32>
    %80 = arith.maximumf %78, %79 : vector<32x1xf32>
    %c0_27 = arith.constant 0 : index
    %c0_28 = arith.constant 0 : index
    %81 = vector.load %arg9[%c0_27, %c0_28] : memref<32x32xf32, #tpu.memory_space<vmem>>, vector<32x32xf32>
    %cst_29 = arith.constant dense<0.000000e+00> : vector<32x1xf32>
    %82 = tpu.matmul %81, %80, %cst_29 {dimension_numbers = #tpu.dot_dimension_numbers<[1], [0], [0], [1], [0, 0, 1, 1], [], []>} : vector<32x32xf32>, vector<32x1xf32>, vector<32x1xf32> -> vector<32x1xf32>
    %c0_30 = arith.constant 0 : index
    %c0_31 = arith.constant 0 : index
    %83 = vector.load %arg10[%c0_30, %c0_31] : memref<32x1xf32, #tpu.memory_space<vmem>>, vector<32x1xf32>
    %84 = arith.addf %82, %83 : vector<32x1xf32>
    %cst_32 = arith.constant 0.000000e+00 : f32
    %85 = vector.broadcast %cst_32 : f32 to vector<32x1xf32>
    %86 = arith.subf %85, %84 : vector<32x1xf32>
    %87 = math.exp %86 : vector<32x1xf32>
    %cst_33 = arith.constant 1.000000e+00 : f32
    %88 = vector.broadcast %cst_33 : f32 to vector<32x1xf32>
    %89 = arith.addf %88, %87 : vector<32x1xf32>
    %cst_34 = arith.constant 1.000000e+00 : f32
    %90 = vector.broadcast %cst_34 : f32 to vector<32x1xf32>
    %91 = arith.divf %90, %89 : vector<32x1xf32>
    %92 = vector.broadcast %74 : vector<32x1xf32> to vector<32x256xf32>
    %93 = arith.mulf %92, %50 : vector<32x256xf32>
    %94 = arith.addf %53, %93 : vector<32x256xf32>
    %95 = vector.broadcast %91 : vector<32x1xf32> to vector<32x256xf32>
    %96 = arith.mulf %95, %51 : vector<32x256xf32>
    %97 = arith.addf %94, %96 : vector<32x256xf32>
    %98 = tpu.transpose %97, [1, 0] : vector<32x256xf32> -> vector<256x32xf32>
    %c0_35 = arith.constant 0 : index
    %c0_36 = arith.constant 0 : index
    %c0_37 = arith.constant 0 : index
    %99 = vector.load %arg11[%c0_35, %c0_36, %c0_37] : memref<2x256x32xf32, #tpu.memory_space<vmem>>, vector<1x256x32xf32>
    %100 = vector.shape_cast %99 : vector<1x256x32xf32> to vector<256x32xf32>
    %101 = vector.shape_cast %98 : vector<256x32xf32> to vector<1x256x32xf32>
    tpu.vector_store %arg11[%c0_35, %c0_36, %c0_37], %101 {strides = array<i32>} : memref<2x256x32xf32, #tpu.memory_space<vmem>>, vector<1x256x32xf32>,
    %c1 = arith.constant 1 : index
    %c0_38 = arith.constant 0 : index
    %c0_39 = arith.constant 0 : index
    %102 = vector.load %arg0[%c1, %c0_38, %c0_39] : memref<2x32x256xf32, #tpu.memory_space<vmem>>, vector<1x32x256xf32>
    %103 = vector.shape_cast %102 : vector<1x32x256xf32> to vector<32x256xf32>
    %cst_40 = arith.constant dense<0.000000e+00> : vector<32xf32>
    %104 = vector.multi_reduction <add>, %103, %cst_40 [1] : vector<32x256xf32> to vector<32xf32>
    %105 = vector.shape_cast %104 : vector<32xf32> to vector<32x1xf32>
    %cst_41 = arith.constant 2.560000e+02 : f32
    %106 = vector.broadcast %cst_41 : f32 to vector<32x1xf32>
    %107 = arith.divf %105, %106 : vector<32x1xf32>
    %c0_42 = arith.constant 0 : index
    %c0_43 = arith.constant 0 : index
    %108 = vector.load %arg3[%c0_42, %c0_43] : memref<32x32xf32, #tpu.memory_space<vmem>>, vector<32x32xf32>
    %cst_44 = arith.constant dense<0.000000e+00> : vector<32x1xf32>
    %109 = tpu.matmul %108, %107, %cst_44 {dimension_numbers = #tpu.dot_dimension_numbers<[1], [0], [0], [1], [0, 0, 1, 1], [], []>} : vector<32x32xf32>, vector<32x1xf32>, vector<32x1xf32> -> vector<32x1xf32>
    %c0_45 = arith.constant 0 : index
    %c0_46 = arith.constant 0 : index
    %110 = vector.load %arg4[%c0_45, %c0_46] : memref<32x1xf32, #tpu.memory_space<vmem>>, vector<32x1xf32>
    %111 = arith.addf %109, %110 : vector<32x1xf32>
    %cst_47 = arith.constant 0.000000e+00 : f32
    %112 = vector.broadcast %cst_47 : f32 to vector<32x1xf32>
    %113 = arith.maximumf %111, %112 : vector<32x1xf32>
    %c0_48 = arith.constant 0 : index
    %c0_49 = arith.constant 0 : index
    %114 = vector.load %arg5[%c0_48, %c0_49] : memref<32x32xf32, #tpu.memory_space<vmem>>, vector<32x32xf32>
    %cst_50 = arith.constant dense<0.000000e+00> : vector<32x1xf32>
    %115 = tpu.matmul %114, %113, %cst_50 {dimension_numbers = #tpu.dot_dimension_numbers<[1], [0], [0], [1], [0, 0, 1, 1], [], []>} : vector<32x32xf32>, vector<32x1xf32>, vector<32x1xf32> -> vector<32x1xf32>
    %c0_51 = arith.constant 0 : index
    %c0_52 = arith.constant 0 : index
    %116 = vector.load %arg6[%c0_51, %c0_52] : memref<32x1xf32, #tpu.memory_space<vmem>>, vector<32x1xf32>
    %117 = arith.addf %115, %116 : vector<32x1xf32>
    %cst_53 = arith.constant 0.000000e+00 : f32
    %118 = vector.broadcast %cst_53 : f32 to vector<32x1xf32>
    %119 = arith.subf %118, %117 : vector<32x1xf32>
    %120 = math.exp %119 : vector<32x1xf32>
    %cst_54 = arith.constant 1.000000e+00 : f32
    %121 = vector.broadcast %cst_54 : f32 to vector<32x1xf32>
    %122 = arith.addf %121, %120 : vector<32x1xf32>
    %cst_55 = arith.constant 1.000000e+00 : f32
    %123 = vector.broadcast %cst_55 : f32 to vector<32x1xf32>
    %124 = arith.divf %123, %122 : vector<32x1xf32>
    %c0_56 = arith.constant 0 : index
    %c0_57 = arith.constant 0 : index
    %125 = vector.load %arg7[%c0_56, %c0_57] : memref<32x32xf32, #tpu.memory_space<vmem>>, vector<32x32xf32>
    %cst_58 = arith.constant dense<0.000000e+00> : vector<32x1xf32>
    %126 = tpu.matmul %125, %107, %cst_58 {dimension_numbers = #tpu.dot_dimension_numbers<[1], [0], [0], [1], [0, 0, 1, 1], [], []>} : vector<32x32xf32>, vector<32x1xf32>, vector<32x1xf32> -> vector<32x1xf32>
    %c0_59 = arith.constant 0 : index
    %c0_60 = arith.constant 0 : index
    %127 = vector.load %arg8[%c0_59, %c0_60] : memref<32x1xf32, #tpu.memory_space<vmem>>, vector<32x1xf32>
    %128 = arith.addf %126, %127 : vector<32x1xf32>
    %cst_61 = arith.constant 0.000000e+00 : f32
    %129 = vector.broadcast %cst_61 : f32 to vector<32x1xf32>
    %130 = arith.maximumf %128, %129 : vector<32x1xf32>
    %c0_62 = arith.constant 0 : index
    %c0_63 = arith.constant 0 : index
    %131 = vector.load %arg9[%c0_62, %c0_63] : memref<32x32xf32, #tpu.memory_space<vmem>>, vector<32x32xf32>
    %cst_64 = arith.constant dense<0.000000e+00> : vector<32x1xf32>
    %132 = tpu.matmul %131, %130, %cst_64 {dimension_numbers = #tpu.dot_dimension_numbers<[1], [0], [0], [1], [0, 0, 1, 1], [], []>} : vector<32x32xf32>, vector<32x1xf32>, vector<32x1xf32> -> vector<32x1xf32>
    %c0_65 = arith.constant 0 : index
    %c0_66 = arith.constant 0 : index
    %133 = vector.load %arg10[%c0_65, %c0_66] : memref<32x1xf32, #tpu.memory_space<vmem>>, vector<32x1xf32>
    %134 = arith.addf %132, %133 : vector<32x1xf32>
    %cst_67 = arith.constant 0.000000e+00 : f32
    %135 = vector.broadcast %cst_67 : f32 to vector<32x1xf32>
    %136 = arith.subf %135, %134 : vector<32x1xf32>
    %137 = math.exp %136 : vector<32x1xf32>
    %cst_68 = arith.constant 1.000000e+00 : f32
    %138 = vector.broadcast %cst_68 : f32 to vector<32x1xf32>
    %139 = arith.addf %138, %137 : vector<32x1xf32>
    %cst_69 = arith.constant 1.000000e+00 : f32
    %140 = vector.broadcast %cst_69 : f32 to vector<32x1xf32>
    %141 = arith.divf %140, %139 : vector<32x1xf32>
    %142 = vector.broadcast %124 : vector<32x1xf32> to vector<32x256xf32>
    %143 = arith.mulf %142, %50 : vector<32x256xf32>
    %144 = arith.addf %103, %143 : vector<32x256xf32>
    %145 = vector.broadcast %141 : vector<32x1xf32> to vector<32x256xf32>
    %146 = arith.mulf %145, %51 : vector<32x256xf32>
    %147 = arith.addf %144, %146 : vector<32x256xf32>
    %148 = tpu.transpose %147, [1, 0] : vector<32x256xf32> -> vector<256x32xf32>
    %c1_70 = arith.constant 1 : index
    %c0_71 = arith.constant 0 : index
    %c0_72 = arith.constant 0 : index
    %149 = vector.load %arg11[%c1_70, %c0_71, %c0_72] : memref<2x256x32xf32, #tpu.memory_space<vmem>>, vector<1x256x32xf32>
    %150 = vector.shape_cast %149 : vector<1x256x32xf32> to vector<256x32xf32>
    %151 = vector.shape_cast %148 : vector<256x32xf32> to vector<1x256x32xf32>
    tpu.vector_store %arg11[%c1_70, %c0_71, %c0_72], %151 {strides = array<i32>} : memref<2x256x32xf32, #tpu.memory_space<vmem>>, vector<1x256x32xf32>,
    return
  }
}

</mosaic_0001>

<llo_original>
// kernel: tpu_custom_call.1
$region0: #{tpu_custom_call.1}
  #allocation0 [shape = 'u32[]', space=smem, size = 0x4, offset = 0x4, fixed_abs, tag = 'smem constant byte address 0x4 - core index']
  #allocation1 [shape = 'u32[144,128]{1,0:T(1,128)}', space=vmem, size = 0x12000, scoped, tag = 'internal scratch']
  %s0 = inlined_call_operand.vmem [shape: f32[2,32,256], index: 0, kind: input, shape index: {}]
  %s1 = inlined_call_operand.vmem [shape: f32[32,16], index: 1, kind: input, shape index: {}]
  %s2 = inlined_call_operand.vmem [shape: f32[32,16], index: 2, kind: input, shape index: {}]
  %s3 = inlined_call_operand.vmem [shape: f32[32,32], index: 3, kind: input, shape index: {}]
  %s4 = inlined_call_operand.vmem [shape: f32[32,1], index: 4, kind: input, shape index: {}]
  %s5 = inlined_call_operand.vmem [shape: f32[32,32], index: 5, kind: input, shape index: {}]
  %s6 = inlined_call_operand.vmem [shape: f32[32,1], index: 6, kind: input, shape index: {}]
  %s7 = inlined_call_operand.vmem [shape: f32[32,32], index: 7, kind: input, shape index: {}]
  %s8 = inlined_call_operand.vmem [shape: f32[32,1], index: 8, kind: input, shape index: {}]
  %s9 = inlined_call_operand.hbm [shape: f32[32,32], index: 9, kind: input, shape index: {}]
  %s10 = inlined_call_operand.vmem [shape: f32[32,1], index: 10, kind: input, shape index: {}]
  %s11 = inlined_call_operand.vmem [shape: f32[2,256,32], index: 11, kind: output, shape index: {}]
  %s12 = sld [smem:[#allocation0]]
  $region58: #{tpu_custom_call.1} parent=0
    _
  %s14 = ssub.s32 1, %s12
  %s15 = scalar_select 0, %s14, %s12
  $region1: #{tpu_custom_call.1} parent=0
    #allocation2 [shape = 'u8[16384]{0}', space=vmem, size = 0x4000, scoped, tag = 'input window, operand 9, single buffered']
    #allocation3 [shape = 's32[1]{0}', space=sflag, size = 0x4, scoped, tag = 'scoped memory for tpu_custom_call.1']
    %16 = vsyncpa [#allocation3], 0
    // Predicated region
    $region2: #{tpu_custom_call.1} parent=1 // pred_check
      _
    $region3: #{tpu_custom_call.1} parent=1 // pred_check_branch
      %18 = sbr.rel (0) target = $region5
    $region4: #{tpu_custom_call.1} parent=1 // pred_region
      _
    $region5: #{tpu_custom_call.1} parent=1 // pred_fallthru
      _
    // Predicated region
    $region6: #{tpu_custom_call.1} parent=1 // pred_check
      _
    $region7: #{tpu_custom_call.1} parent=1 // pred_check_branch
      %20 = sbr.rel (0) target = $region9
    $region8: #{tpu_custom_call.1} parent=1 // pred_region
      _
    $region9: #{tpu_custom_call.1} parent=1 // pred_fallthru
      _
    // Predicated region
    $region10: #{tpu_custom_call.1} parent=1 // pred_check
      _
    $region11: #{tpu_custom_call.1} parent=1 // pred_check_branch
      %22 = sbr.rel (0) target = $region13
    $region12: #{tpu_custom_call.1} parent=1 // pred_region
      _
    $region13: #{tpu_custom_call.1} parent=1 // pred_fallthru
      _
    // Predicated region
    $region14: #{tpu_custom_call.1} parent=1 // pred_check
      _
    $region15: #{tpu_custom_call.1} parent=1 // pred_check_branch
      %24 = sbr.rel (0) target = $region17
    $region16: #{tpu_custom_call.1} parent=1 // pred_region
      _
    $region17: #{tpu_custom_call.1} parent=1 // pred_fallthru
      _
    // Predicated region
    $region18: #{tpu_custom_call.1} parent=1 // pred_check
      _
    $region19: #{tpu_custom_call.1} parent=1 // pred_check_branch
      %26 = sbr.rel (0) target = $region21
    $region20: #{tpu_custom_call.1} parent=1 // pred_region
      _
    $region21: #{tpu_custom_call.1} parent=1 // pred_fallthru
      _
    // Predicated region
    $region22: #{tpu_custom_call.1} parent=1 // pred_check
      _
    $region23: #{tpu_custom_call.1} parent=1 // pred_check_branch
      %28 = sbr.rel (0) target = $region25
    $region24: #{tpu_custom_call.1} parent=1 // pred_region
      _
    $region25: #{tpu_custom_call.1} parent=1 // pred_fallthru
      _
    // Predicated region
    $region26: #{tpu_custom_call.1} parent=1 // pred_check
      _
    $region27: #{tpu_custom_call.1} parent=1 // pred_check_branch
      %30 = sbr.rel (0) target = $region29
    $region28: #{tpu_custom_call.1} parent=1 // pred_region
      _
    $region29: #{tpu_custom_call.1} parent=1 // pred_fallthru
      _
    // Predicated region
    $region30: #{tpu_custom_call.1} parent=1 // pred_check
      _
    $region31: #{tpu_custom_call.1} parent=1 // pred_check_branch
      %32 = sbr.rel (0) target = $region33
    $region32: #{tpu_custom_call.1} parent=1 // pred_region
      _
    $region33: #{tpu_custom_call.1} parent=1 // pred_fallthru
      _
    // Predicated region
    $region34: #{tpu_custom_call.1} parent=1 // pred_check
      _
    $region35: #{tpu_custom_call.1} parent=1 // pred_check_branch
      %34 = sbr.rel (0) target = $region37
    $region36: #{tpu_custom_call.1} parent=1 // pred_region
      _
    $region37: #{tpu_custom_call.1} parent=1 // pred_fallthru
      _
    // Predicated region
    $region38: #{tpu_custom_call.1} parent=1 // pred_check
      _
    $region39: #{tpu_custom_call.1} parent=1 // pred_check_branch
      %36 = sbr.rel (0) target = $region41
    $region40: #{tpu_custom_call.1} parent=1 // pred_region
      %s38 = ssub.s32 512, 512
      %39 = vsyncadd [#allocation3], %s38
      %s40 = sshll.u32 [#allocation2], 4
      %s41 = int_to_ptr.vmem [resolvable:$true] %s40
      %46 = dma.hbm_to_vmem [thread:$0]  %s9, 512, %s41, [#allocation3], 128, 128, 8
    $region41: #{tpu_custom_call.1} parent=1 // pred_fallthru
      _
    // Predicated region
    $region42: #{tpu_custom_call.1} parent=1 // pred_check
      _
    $region43: #{tpu_custom_call.1} parent=1 // pred_check_branch
      %48 = sbr.rel (0) target = $region45
    $region44: #{tpu_custom_call.1} parent=1 // pred_region
      _
    $region45: #{tpu_custom_call.1} parent=1 // pred_fallthru
      _
    // Predicated region
    $region46: #{tpu_custom_call.1} parent=1 // pred_check
      _
    $region47: #{tpu_custom_call.1} parent=1 // pred_check_branch
      %50 = sbr.rel (0) target = $region49
    $region48: #{tpu_custom_call.1} parent=1 // pred_region
      %51 = dma.done [#allocation3], 512
    $region49: #{tpu_custom_call.1} parent=1 // pred_fallthru
      _
    %v52 = vld [vmem:[%s1] sm:$0xff]
    %v53 = vld [vmem:[%s1 + $0x8] sm:$0xff]
    %v54 = vld [vmem:[%s1 + $0x10] sm:$0xff]
    %v55 = vld [vmem:[%s1 + $0x18] sm:$0xff]
    %v56 = vld [vmem:[%s2] sm:$0xff]
    %v57 = vld [vmem:[%s2 + $0x8] sm:$0xff]
    %v58 = vld [vmem:[%s2 + $0x10] sm:$0xff]
    %v59 = vld [vmem:[%s2 + $0x18] sm:$0xff]
    %61 = vset.pattern.permute.xlu0 0
    %62 = vperm.xlu0 %61, %v52
    %v63 = vpop.permute.xlu0 %62
    %66 = vset.pattern.permute.xlu0 0
    %67 = vperm.xlu0 %66, %v53
    %v68 = vpop.permute.xlu0 %67
    %71 = vset.pattern.permute.xlu0 0
    %72 = vperm.xlu0 %71, %v54
    %v73 = vpop.permute.xlu0 %72
    %76 = vset.pattern.permute.xlu0 0
    %77 = vperm.xlu0 %76, %v55
    %v78 = vpop.permute.xlu0 %77
    %80 = vset.pattern.permute.xlu0 1
    %81 = vperm.xlu0 %80, %v52
    %v82 = vpop.permute.xlu0 %81
    %84 = vset.pattern.permute.xlu0 1
    %85 = vperm.xlu0 %84, %v53
    %v86 = vpop.permute.xlu0 %85
    %88 = vset.pattern.permute.xlu0 1
    %89 = vperm.xlu0 %88, %v54
    %v90 = vpop.permute.xlu0 %89
    %92 = vset.pattern.permute.xlu0 1
    %93 = vperm.xlu0 %92, %v55
    %v94 = vpop.permute.xlu0 %93
    %96 = vset.pattern.permute.xlu0 2
    %97 = vperm.xlu0 %96, %v52
    %v98 = vpop.permute.xlu0 %97
    %100 = vset.pattern.permute.xlu0 2
    %101 = vperm.xlu0 %100, %v53
    %v102 = vpop.permute.xlu0 %101
    %104 = vset.pattern.permute.xlu0 2
    %105 = vperm.xlu0 %104, %v54
    %v106 = vpop.permute.xlu0 %105
    %108 = vset.pattern.permute.xlu0 2
    %109 = vperm.xlu0 %108, %v55
    %v110 = vpop.permute.xlu0 %109
    %112 = vset.pattern.permute.xlu0 3
    %113 = vperm.xlu0 %112, %v52
    %v114 = vpop.permute.xlu0 %113
    %116 = vset.pattern.permute.xlu0 3
    %117 = vperm.xlu0 %116, %v53
    %v118 = vpop.permute.xlu0 %117
    %120 = vset.pattern.permute.xlu0 3
    %121 = vperm.xlu0 %120, %v54
    %v122 = vpop.permute.xlu0 %121
    %124 = vset.pattern.permute.xlu0 3
    %125 = vperm.xlu0 %124, %v55
    %v126 = vpop.permute.xlu0 %125
    %128 = vset.pattern.permute.xlu0 4
    %129 = vperm.xlu0 %128, %v52
    %v130 = vpop.permute.xlu0 %129
    %132 = vset.pattern.permute.xlu0 4
    %133 = vperm.xlu0 %132, %v53
    %v134 = vpop.permute.xlu0 %133
    %136 = vset.pattern.permute.xlu0 4
    %137 = vperm.xlu0 %136, %v54
    %v138 = vpop.permute.xlu0 %137
    %140 = vset.pattern.permute.xlu0 4
    %141 = vperm.xlu0 %140, %v55
    %v142 = vpop.permute.xlu0 %141
    %144 = vset.pattern.permute.xlu0 5
    %145 = vperm.xlu0 %144, %v52
    %v146 = vpop.permute.xlu0 %145
    %148 = vset.pattern.permute.xlu0 5
    %149 = vperm.xlu0 %148, %v53
    %v150 = vpop.permute.xlu0 %149
    %152 = vset.pattern.permute.xlu0 5
    %153 = vperm.xlu0 %152, %v54
    %v154 = vpop.permute.xlu0 %153
    %156 = vset.pattern.permute.xlu0 5
    %157 = vperm.xlu0 %156, %v55
    %v158 = vpop.permute.xlu0 %157
    %160 = vset.pattern.permute.xlu0 6
    %161 = vperm.xlu0 %160, %v52
    %v162 = vpop.permute.xlu0 %161
    %164 = vset.pattern.permute.xlu0 6
    %165 = vperm.xlu0 %164, %v53
    %v166 = vpop.permute.xlu0 %165
    %168 = vset.pattern.permute.xlu0 6
    %169 = vperm.xlu0 %168, %v54
    %v170 = vpop.permute.xlu0 %169
    %172 = vset.pattern.permute.xlu0 6
    %173 = vperm.xlu0 %172, %v55
    %v174 = vpop.permute.xlu0 %173
    %176 = vset.pattern.permute.xlu0 7
    %177 = vperm.xlu0 %176, %v52
    %v178 = vpop.permute.xlu0 %177
    %180 = vset.pattern.permute.xlu0 7
    %181 = vperm.xlu0 %180, %v53
    %v182 = vpop.permute.xlu0 %181
    %184 = vset.pattern.permute.xlu0 7
    %185 = vperm.xlu0 %184, %v54
    %v186 = vpop.permute.xlu0 %185
    %188 = vset.pattern.permute.xlu0 7
    %189 = vperm.xlu0 %188, %v55
    %v190 = vpop.permute.xlu0 %189
    %192 = vset.pattern.permute.xlu0 8
    %193 = vperm.xlu0 %192, %v52
    %v194 = vpop.permute.xlu0 %193
    %196 = vset.pattern.permute.xlu0 8
    %197 = vperm.xlu0 %196, %v53
    %v198 = vpop.permute.xlu0 %197
    %200 = vset.pattern.permute.xlu0 8
    %201 = vperm.xlu0 %200, %v54
    %v202 = vpop.permute.xlu0 %201
    %204 = vset.pattern.permute.xlu0 8
    %205 = vperm.xlu0 %204, %v55
    %v206 = vpop.permute.xlu0 %205
    %208 = vset.pattern.permute.xlu0 9
    %209 = vperm.xlu0 %208, %v52
    %v210 = vpop.permute.xlu0 %209
    %212 = vset.pattern.permute.xlu0 9
    %213 = vperm.xlu0 %212, %v53
    %v214 = vpop.permute.xlu0 %213
    %216 = vset.pattern.permute.xlu0 9
    %217 = vperm.xlu0 %216, %v54
    %v218 = vpop.permute.xlu0 %217
    %220 = vset.pattern.permute.xlu0 9
    %221 = vperm.xlu0 %220, %v55
    %v222 = vpop.permute.xlu0 %221
    %224 = vset.pattern.permute.xlu0 10
    %225 = vperm.xlu0 %224, %v52
    %v226 = vpop.permute.xlu0 %225
    %228 = vset.pattern.permute.xlu0 10
    %229 = vperm.xlu0 %228, %v53
    %v230 = vpop.permute.xlu0 %229
    %232 = vset.pattern.permute.xlu0 10
    %233 = vperm.xlu0 %232, %v54
    %v234 = vpop.permute.xlu0 %233
    %236 = vset.pattern.permute.xlu0 10
    %237 = vperm.xlu0 %236, %v55
    %v238 = vpop.permute.xlu0 %237
    %240 = vset.pattern.permute.xlu0 11
    %241 = vperm.xlu0 %240, %v52
    %v242 = vpop.permute.xlu0 %241
    %244 = vset.pattern.permute.xlu0 11
    %245 = vperm.xlu0 %244, %v53
    %v246 = vpop.permute.xlu0 %245
    %248 = vset.pattern.permute.xlu0 11
    %249 = vperm.xlu0 %248, %v54
    %v250 = vpop.permute.xlu0 %249
    %252 = vset.pattern.permute.xlu0 11
    %253 = vperm.xlu0 %252, %v55
    %v254 = vpop.permute.xlu0 %253
    %256 = vset.pattern.permute.xlu0 12
    %257 = vperm.xlu0 %256, %v52
    %v258 = vpop.permute.xlu0 %257
    %260 = vset.pattern.permute.xlu0 12
    %261 = vperm.xlu0 %260, %v53
    %v262 = vpop.permute.xlu0 %261
    %264 = vset.pattern.permute.xlu0 12
    %265 = vperm.xlu0 %264, %v54
    %v266 = vpop.permute.xlu0 %265
    %268 = vset.pattern.permute.xlu0 12
    %269 = vperm.xlu0 %268, %v55
    %v270 = vpop.permute.xlu0 %269
    %272 = vset.pattern.permute.xlu0 13
    %273 = vperm.xlu0 %272, %v52
    %v274 = vpop.permute.xlu0 %273
    %276 = vset.pattern.permute.xlu0 13
    %277 = vperm.xlu0 %276, %v53
    %v278 = vpop.permute.xlu0 %277
    %280 = vset.pattern.permute.xlu0 13
    %281 = vperm.xlu0 %280, %v54
    %v282 = vpop.permute.xlu0 %281
    %284 = vset.pattern.permute.xlu0 13
    %285 = vperm.xlu0 %284, %v55
    %v286 = vpop.permute.xlu0 %285
    %288 = vset.pattern.permute.xlu0 14
    %289 = vperm.xlu0 %288, %v52
    %v290 = vpop.permute.xlu0 %289
    %292 = vset.pattern.permute.xlu0 14
    %293 = vperm.xlu0 %292, %v53
    %v294 = vpop.permute.xlu0 %293
    %296 = vset.pattern.permute.xlu0 14
    %297 = vperm.xlu0 %296, %v54
    %v298 = vpop.permute.xlu0 %297
    %300 = vset.pattern.permute.xlu0 14
    %301 = vperm.xlu0 %300, %v55
    %v302 = vpop.permute.xlu0 %301
    %304 = vset.pattern.permute.xlu0 15
    %305 = vperm.xlu0 %304, %v52
    %v306 = vpop.permute.xlu0 %305
    %308 = vset.pattern.permute.xlu0 15
    %309 = vperm.xlu0 %308, %v53
    %v310 = vpop.permute.xlu0 %309
    %312 = vset.pattern.permute.xlu0 15
    %313 = vperm.xlu0 %312, %v54
    %v314 = vpop.permute.xlu0 %313
    %316 = vset.pattern.permute.xlu0 15
    %317 = vperm.xlu0 %316, %v55
    %v318 = vpop.permute.xlu0 %317
    %vm320 = vcmask 130048
    %v321 = vsel %vm320, %v63, %v82
    %v322 = vsel %vm320, %v68, %v86
    %v323 = vsel %vm320, %v73, %v90
    %v324 = vsel %vm320, %v78, %v94
    %vm325 = vcmask 261120
    %v326 = vsel %vm325, %v321, %v98
    %v327 = vsel %vm325, %v322, %v102
    %v328 = vsel %vm325, %v323, %v106
    %v329 = vsel %vm325, %v324, %v110
    %vm330 = vcmask 392192
    %v331 = vsel %vm330, %v326, %v114
    %v332 = vsel %vm330, %v327, %v118
    %v333 = vsel %vm330, %v328, %v122
    %v334 = vsel %vm330, %v329, %v126
    %vm335 = vcmask 523264
    %v336 = vsel %vm335, %v331, %v130
    %v337 = vsel %vm335, %v332, %v134
    %v338 = vsel %vm335, %v333, %v138
    %v339 = vsel %vm335, %v334, %v142
    %vm340 = vcmask 654336
    %v341 = vsel %vm340, %v336, %v146
    %v342 = vsel %vm340, %v337, %v150
    %v343 = vsel %vm340, %v338, %v154
    %v344 = vsel %vm340, %v339, %v158
    %vm345 = vcmask 785408
    %v346 = vsel %vm345, %v341, %v162
    %v347 = vsel %vm345, %v342, %v166
    %v348 = vsel %vm345, %v343, %v170
    %v349 = vsel %vm345, %v344, %v174
    %vm350 = vcmask 916480
    %v351 = vsel %vm350, %v346, %v178
    %v352 = vsel %vm350, %v347, %v182
    %v353 = vsel %vm350, %v348, %v186
    %v354 = vsel %vm350, %v349, %v190
    %v355 = vsel %vm320, %v194, %v210
    %v356 = vsel %vm320, %v198, %v214
    %v357 = vsel %vm320, %v202, %v218
    %v358 = vsel %vm320, %v206, %v222
    %v359 = vsel %vm325, %v355, %v226
    %v360 = vsel %vm325, %v356, %v230
    %v361 = vsel %vm325, %v357, %v234
    %v362 = vsel %vm325, %v358, %v238
    %v363 = vsel %vm330, %v359, %v242
    %v364 = vsel %vm330, %v360, %v246
    %v365 = vsel %vm330, %v361, %v250
    %v366 = vsel %vm330, %v362, %v254
    %v367 = vsel %vm335, %v363, %v258
    %v368 = vsel %vm335, %v364, %v262
    %v369 = vsel %vm335, %v365, %v266
    %v370 = vsel %vm335, %v366, %v270
    %v371 = vsel %vm340, %v367, %v274
    %v372 = vsel %vm340, %v368, %v278
    %v373 = vsel %vm340, %v369, %v282
    %v374 = vsel %vm340, %v370, %v286
    %v375 = vsel %vm345, %v371, %v290
    %v376 = vsel %vm345, %v372, %v294
    %v377 = vsel %vm345, %v373, %v298
    %v378 = vsel %vm345, %v374, %v302
    %v379 = vsel %vm350, %v375, %v306
    %v380 = vsel %vm350, %v376, %v310
    %v381 = vsel %vm350, %v377, %v314
    %v382 = vsel %vm350, %v378, %v318
    %387 = vrot.lane.b32.xlu0 %v56, 16
    %v388 = vpop.permute.xlu0 %387
    %389 = vrot.lane.b32.xlu0 %v57, 16
    %v390 = vpop.permute.xlu0 %389
    %391 = vrot.lane.b32.xlu0 %v58, 16
    %v392 = vpop.permute.xlu0 %391
    %393 = vrot.lane.b32.xlu0 %v59, 16
    %v394 = vpop.permute.xlu0 %393
    %399 = vrot.lane.b32.xlu0 %v56, 32
    %v400 = vpop.permute.xlu0 %399
    %401 = vrot.lane.b32.xlu0 %v57, 32
    %v402 = vpop.permute.xlu0 %401
    %403 = vrot.lane.b32.xlu0 %v58, 32
    %v404 = vpop.permute.xlu0 %403
    %405 = vrot.lane.b32.xlu0 %v59, 32
    %v406 = vpop.permute.xlu0 %405
    %411 = vrot.lane.b32.xlu0 %v56, 48
    %v412 = vpop.permute.xlu0 %411
    %413 = vrot.lane.b32.xlu0 %v57, 48
    %v414 = vpop.permute.xlu0 %413
    %415 = vrot.lane.b32.xlu0 %v58, 48
    %v416 = vpop.permute.xlu0 %415
    %417 = vrot.lane.b32.xlu0 %v59, 48
    %v418 = vpop.permute.xlu0 %417
    %423 = vrot.lane.b32.xlu0 %v56, 64
    %v424 = vpop.permute.xlu0 %423
    %425 = vrot.lane.b32.xlu0 %v57, 64
    %v426 = vpop.permute.xlu0 %425
    %427 = vrot.lane.b32.xlu0 %v58, 64
    %v428 = vpop.permute.xlu0 %427
    %429 = vrot.lane.b32.xlu0 %v59, 64
    %v430 = vpop.permute.xlu0 %429
    %435 = vrot.lane.b32.xlu0 %v56, 80
    %v436 = vpop.permute.xlu0 %435
    %437 = vrot.lane.b32.xlu0 %v57, 80
    %v438 = vpop.permute.xlu0 %437
    %439 = vrot.lane.b32.xlu0 %v58, 80
    %v440 = vpop.permute.xlu0 %439
    %441 = vrot.lane.b32.xlu0 %v59, 80
    %v442 = vpop.permute.xlu0 %441
    %447 = vrot.lane.b32.xlu0 %v56, 96
    %v448 = vpop.permute.xlu0 %447
    %449 = vrot.lane.b32.xlu0 %v57, 96
    %v450 = vpop.permute.xlu0 %449
    %451 = vrot.lane.b32.xlu0 %v58, 96
    %v452 = vpop.permute.xlu0 %451
    %453 = vrot.lane.b32.xlu0 %v59, 96
    %v454 = vpop.permute.xlu0 %453
    %459 = vrot.lane.b32.xlu0 %v56, 112
    %v460 = vpop.permute.xlu0 %459
    %461 = vrot.lane.b32.xlu0 %v57, 112
    %v462 = vpop.permute.xlu0 %461
    %463 = vrot.lane.b32.xlu0 %v58, 112
    %v464 = vpop.permute.xlu0 %463
    %465 = vrot.lane.b32.xlu0 %v59, 112
    %v466 = vpop.permute.xlu0 %465
    %v471 = vsel %vm320, %v56, %v388
    %v472 = vsel %vm320, %v57, %v390
    %v473 = vsel %vm320, %v58, %v392
    %v474 = vsel %vm320, %v59, %v394
    %v475 = vsel %vm325, %v471, %v400
    %v476 = vsel %vm325, %v472, %v402
    %v477 = vsel %vm325, %v473, %v404
    %v478 = vsel %vm325, %v474, %v406
    %v479 = vsel %vm330, %v475, %v412
    %v480 = vsel %vm330, %v476, %v414
    %v481 = vsel %vm330, %v477, %v416
    %v482 = vsel %vm330, %v478, %v418
    %v483 = vsel %vm335, %v479, %v424
    %v484 = vsel %vm335, %v480, %v426
    %v485 = vsel %vm335, %v481, %v428
    %v486 = vsel %vm335, %v482, %v430
    %v487 = vsel %vm340, %v483, %v436
    %v488 = vsel %vm340, %v484, %v438
    %v489 = vsel %vm340, %v485, %v440
    %v490 = vsel %vm340, %v486, %v442
    %v491 = vsel %vm345, %v487, %v448
    %v492 = vsel %vm345, %v488, %v450
    %v493 = vsel %vm345, %v489, %v452
    %v494 = vsel %vm345, %v490, %v454
    %v495 = vsel %vm350, %v491, %v460
    %v496 = vsel %vm350, %v492, %v462
    %v497 = vsel %vm350, %v493, %v464
    %v498 = vsel %vm350, %v494, %v466
    %v499 = vld [vmem:[%s0] sm:$0xff]
    %v500 = vld [vmem:[%s0 + $0x8] sm:$0xff]
    %v501 = vld [vmem:[%s0 + $0x10] sm:$0xff]
    %v502 = vld [vmem:[%s0 + $0x18] sm:$0xff]
    %v503 = vld [vmem:[%s0 + $0x20] sm:$0xff]
    %v504 = vld [vmem:[%s0 + $0x28] sm:$0xff]
    %v505 = vld [vmem:[%s0 + $0x30] sm:$0xff]
    %v506 = vld [vmem:[%s0 + $0x38] sm:$0xff]
    %v507 = vadd.f32 %v499, %v500
    %508 = vadd.xlane.f32.xlu0 %v507
    %v509 = vpop.xlane.xlu0 %508
    %v510 = vadd.f32 %v501, %v502
    %511 = vadd.xlane.f32.xlu0 %v510
    %v512 = vpop.xlane.xlu0 %511
    %v513 = vadd.f32 %v503, %v504
    %514 = vadd.xlane.f32.xlu0 %v513
    %v515 = vpop.xlane.xlu0 %514
    %v516 = vadd.f32 %v505, %v506
    %517 = vadd.xlane.f32.xlu0 %v516
    %v518 = vpop.xlane.xlu0 %517
    %v519 = vrcp.pop 256.0
    %v520 = vmul.f32 %v509, %v519
    %v521 = vmul.f32 %v512, %v519
    %v522 = vmul.f32 %v515, %v519
    %v523 = vmul.f32 %v518, %v519
    %v524 = vld [vmem:[%s3] sm:$0xff]
    %v525 = vld [vmem:[%s3 + $0x8] sm:$0xff]
    %v526 = vld [vmem:[%s3 + $0x10] sm:$0xff]
    %v527 = vld [vmem:[%s3 + $0x18] sm:$0xff]
    %v528 = vld [vmem:[%s4] sm:$0xff]
    %v529 = vld [vmem:[%s4 + $0x8] sm:$0xff]
    %v530 = vld [vmem:[%s4 + $0x10] sm:$0xff]
    %v531 = vld [vmem:[%s4 + $0x18] sm:$0xff]
    %v533 = vsel %vm325, %v524, 0
    %v536 = vsel %vm325, %v525, 0
    %v539 = vsel %vm325, %v526, 0
    %v542 = vsel %vm325, %v527, 0
    %544 = vmatprep.subr.mxu0 0.0
    %545 = vmatpush1.msra.mxu0 0.0
    %546 = vmatprep.subr.mxu0 0.0
    %547 = vmatpush1.msra.mxu0 0.0
    %548 = vmatprep.subr.mxu0 0.0
    %549 = vmatpush1.msra.mxu0 0.0
    %550 = vmatprep.subr.mxu0 0.0
    %551 = vmatpush1.msra.mxu0 0.0
    %552 = vmatprep.subr.mxu0 0.0
    %553 = vmatpush1.msra.mxu0 0.0
    %554 = vmatprep.subr.mxu0 0.0
    %555 = vmatpush1.msra.mxu0 0.0
    %556 = vmatprep.subr.mxu0 0.0
    %557 = vmatpush1.msra.mxu0 0.0
    %558 = vmatprep.subr.mxu0 0.0
    %559 = vmatpush1.msra.mxu0 0.0
    %560 = vmatprep.subr.mxu0 0.0
    %561 = vmatpush1.msra.mxu0 0.0
    %562 = vmatprep.subr.mxu0 0.0
    %563 = vmatpush1.msra.mxu0 0.0
    %564 = vmatprep.subr.mxu0 0.0
    %565 = vmatpush1.msra.mxu0 0.0
    %566 = vmatprep.subr.mxu0 0.0
    %567 = vmatpush1.msra.mxu0 0.0
    %568 = vmatprep.subr.mxu0 0.0
    %569 = vmatpush1.msra.mxu0 %v523
    %570 = vmatprep.subr.mxu0 0.0
    %571 = vmatpush1.msra.mxu0 %v522
    %572 = vmatprep.subr.mxu0 0.0
    %573 = vmatpush1.msra.mxu0 %v521
    %574 = vmatprep.subr.mxu0 0.0
    %575 = vmatpush1.msra.mxu0 %v520
    %576 = vmatprep.subr.mxu0 0.0
    %577 = vmatpush2.msra.mxu0 0.0
    %578 = vmatprep.subr.mxu0 0.0
    %579 = vmatpush2.msra.mxu0 0.0
    %580 = vmatprep.subr.mxu0 0.0
    %581 = vmatpush2.msra.mxu0 0.0
    %582 = vmatprep.subr.mxu0 0.0
    %583 = vmatpush2.msra.mxu0 0.0
    %584 = vmatprep.subr.mxu0 0.0
    %585 = vmatpush2.msra.mxu0 0.0
    %586 = vmatprep.subr.mxu0 0.0
    %587 = vmatpush2.msra.mxu0 0.0
    %588 = vmatprep.subr.mxu0 0.0
    %589 = vmatpush2.msra.mxu0 0.0
    %590 = vmatprep.subr.mxu0 0.0
    %591 = vmatpush2.msra.mxu0 0.0
    %592 = vmatprep.subr.mxu0 0.0
    %593 = vmatpush2.msra.mxu0 0.0
    %594 = vmatprep.subr.mxu0 0.0
    %595 = vmatpush2.msra.mxu0 0.0
    %596 = vmatprep.subr.mxu0 0.0
    %597 = vmatpush2.msra.mxu0 0.0
    %598 = vmatprep.subr.mxu0 0.0
    %599 = vmatpush2.msra.mxu0 0.0
    %600 = vmatprep.subr.mxu0 0.0
    %601 = vmatpush2.msra.mxu0 0.0
    %602 = vmatprep.subr.mxu0 0.0
    %603 = vmatpush2.msra.mxu0 0.0
    %604 = vmatprep.subr.mxu0 0.0
    %605 = vmatpush2.msra.mxu0 0.0
    %606 = vmatprep.subr.mxu0 0.0
    %607 = vmatpush2.msra.mxu0 0.0
    %608 = vmatprep.mubr.f32.mxu0 0.0
    %609 = vmatmul.mubr.f32.gmra.mxu0 %v533
    %v610 = vpop.f32.mrf.mxu0
    %v611 = vadd.f32 %v528, %v610
    %v612 = vpop.f32.mrf.mxu0
    %613 = vmatprep.mubr.f32.mxu0 0.0
    %614 = vmatmul.mubr.f32.gmra.mxu0 %v536
    %v615 = vpop.f32.mrf.mxu0
    %v616 = vadd.f32 %v529, %v615
    %v617 = vpop.f32.mrf.mxu0
    %618 = vmatprep.mubr.f32.mxu0 0.0
    %619 = vmatmul.mubr.f32.gmra.mxu0 %v539
    %v620 = vpop.f32.mrf.mxu0
    %v621 = vadd.f32 %v530, %v620
    %v622 = vpop.f32.mrf.mxu0
    %623 = vmatprep.mubr.f32.mxu0 0.0
    %624 = vmatmul.mubr.f32.gmra.mxu0 %v542
    %v625 = vpop.f32.mrf.mxu0
    %v626 = vadd.f32 %v531, %v625
    %v627 = vpop.f32.mrf.mxu0
    %628 = vdwg.mxu0
    %v629 = vmax.f32 %v611, 0.0
    %v630 = vmax.f32 %v616, 0.0
    %v631 = vmax.f32 %v621, 0.0
    %v632 = vmax.f32 %v626, 0.0
    %v633 = vld [vmem:[%s5] sm:$0xff]
    %v634 = vld [vmem:[%s5 + $0x8] sm:$0xff]
    %v635 = vld [vmem:[%s5 + $0x10] sm:$0xff]
    %v636 = vld [vmem:[%s5 + $0x18] sm:$0xff]
    %v637 = vld [vmem:[%s6] sm:$0xff]
    %v638 = vld [vmem:[%s6 + $0x8] sm:$0xff]
    %v639 = vld [vmem:[%s6 + $0x10] sm:$0xff]
    %v640 = vld [vmem:[%s6 + $0x18] sm:$0xff]
    %v642 = vsel %vm325, %v633, 0
    %v645 = vsel %vm325, %v634, 0
    %v648 = vsel %vm325, %v635, 0
    %v651 = vsel %vm325, %v636, 0
    %653 = vmatprep.subr.mxu0 0.0
    %654 = vmatpush1.msra.mxu0 0.0
    %655 = vmatprep.subr.mxu0 0.0
    %656 = vmatpush1.msra.mxu0 0.0
    %657 = vmatprep.subr.mxu0 0.0
    %658 = vmatpush1.msra.mxu0 0.0
    %659 = vmatprep.subr.mxu0 0.0
    %660 = vmatpush1.msra.mxu0 0.0
    %661 = vmatprep.subr.mxu0 0.0
    %662 = vmatpush1.msra.mxu0 0.0
    %663 = vmatprep.subr.mxu0 0.0
    %664 = vmatpush1.msra.mxu0 0.0
    %665 = vmatprep.subr.mxu0 0.0
    %666 = vmatpush1.msra.mxu0 0.0
    %667 = vmatprep.subr.mxu0 0.0
    %668 = vmatpush1.msra.mxu0 0.0
    %669 = vmatprep.subr.mxu0 0.0
    %670 = vmatpush1.msra.mxu0 0.0
    %671 = vmatprep.subr.mxu0 0.0
    %672 = vmatpush1.msra.mxu0 0.0
    %673 = vmatprep.subr.mxu0 0.0
    %674 = vmatpush1.msra.mxu0 0.0
    %675 = vmatprep.subr.mxu0 0.0
    %676 = vmatpush1.msra.mxu0 0.0
    %677 = vmatprep.subr.mxu0 0.0
    %678 = vmatpush1.msra.mxu0 %v632
    %679 = vmatprep.subr.mxu0 0.0
    %680 = vmatpush1.msra.mxu0 %v631
    %681 = vmatprep.subr.mxu0 0.0
    %682 = vmatpush1.msra.mxu0 %v630
    %683 = vmatprep.subr.mxu0 0.0
    %684 = vmatpush1.msra.mxu0 %v629
    %685 = vmatprep.subr.mxu0 0.0
    %686 = vmatpush2.msra.mxu0 0.0
    %687 = vmatprep.subr.mxu0 0.0
    %688 = vmatpush2.msra.mxu0 0.0
    %689 = vmatprep.subr.mxu0 0.0
    %690 = vmatpush2.msra.mxu0 0.0
    %691 = vmatprep.subr.mxu0 0.0
    %692 = vmatpush2.msra.mxu0 0.0
    %693 = vmatprep.subr.mxu0 0.0
    %694 = vmatpush2.msra.mxu0 0.0
    %695 = vmatprep.subr.mxu0 0.0
    %696 = vmatpush2.msra.mxu0 0.0
    %697 = vmatprep.subr.mxu0 0.0
    %698 = vmatpush2.msra.mxu0 0.0
    %699 = vmatprep.subr.mxu0 0.0
    %700 = vmatpush2.msra.mxu0 0.0
    %701 = vmatprep.subr.mxu0 0.0
    %702 = vmatpush2.msra.mxu0 0.0
    %703 = vmatprep.subr.mxu0 0.0
    %704 = vmatpush2.msra.mxu0 0.0
    %705 = vmatprep.subr.mxu0 0.0
    %706 = vmatpush2.msra.mxu0 0.0
    %707 = vmatprep.subr.mxu0 0.0
    %708 = vmatpush2.msra.mxu0 0.0
    %709 = vmatprep.subr.mxu0 0.0
    %710 = vmatpush2.msra.mxu0 0.0
    %711 = vmatprep.subr.mxu0 0.0
    %712 = vmatpush2.msra.mxu0 0.0
    %713 = vmatprep.subr.mxu0 0.0
    %714 = vmatpush2.msra.mxu0 0.0
    %715 = vmatprep.subr.mxu0 0.0
    %716 = vmatpush2.msra.mxu0 0.0
    %717 = vmatprep.mubr.f32.mxu0 0.0
    %718 = vmatmul.mubr.f32.gmra.mxu0 %v642
    %v719 = vpop.f32.mrf.mxu0
    %v720 = vadd.f32 %v637, %v719
    %v721 = vpop.f32.mrf.mxu0
    %722 = vmatprep.mubr.f32.mxu0 0.0
    %723 = vmatmul.mubr.f32.gmra.mxu0 %v645
    %v724 = vpop.f32.mrf.mxu0
    %v725 = vadd.f32 %v638, %v724
    %v726 = vpop.f32.mrf.mxu0
    %727 = vmatprep.mubr.f32.mxu0 0.0
    %728 = vmatmul.mubr.f32.gmra.mxu0 %v648
    %v729 = vpop.f32.mrf.mxu0
    %v730 = vadd.f32 %v639, %v729
    %v731 = vpop.f32.mrf.mxu0
    %732 = vmatprep.mubr.f32.mxu0 0.0
    %733 = vmatmul.mubr.f32.gmra.mxu0 %v651
    %v734 = vpop.f32.mrf.mxu0
    %v735 = vadd.f32 %v640, %v734
    %v736 = vpop.f32.mrf.mxu0
    %737 = vdwg.mxu0
    %v738 = vsub.f32 0.0, %v720
    %v739 = vsub.f32 0.0, %v725
    %v740 = vsub.f32 0.0, %v730
    %v741 = vsub.f32 0.0, %v735
    %v742 = vmul.f32 %v738, 1.442695
    %v743 = vpow.pop %v742
    %v744 = vmul.f32 %v739, 1.442695
    %v745 = vpow.pop %v744
    %v746 = vmul.f32 %v740, 1.442695
    %v747 = vpow.pop %v746
    %v748 = vmul.f32 %v741, 1.442695
    %v749 = vpow.pop %v748
    %v750 = vadd.f32 %v743, 1.0
    %v751 = vadd.f32 %v745, 1.0
    %v752 = vadd.f32 %v747, 1.0
    %v753 = vadd.f32 %v749, 1.0
    %v754 = vrcp.pop %v750
    %v755 = vmul.f32 1.0, %v754
    %v756 = vrcp.pop %v751
    %v757 = vmul.f32 1.0, %v756
    %v758 = vrcp.pop %v752
    %v759 = vmul.f32 1.0, %v758
    %v760 = vrcp.pop %v753
    %v761 = vmul.f32 1.0, %v760
    %v762 = vld [vmem:[%s7] sm:$0xff]
    %v763 = vld [vmem:[%s7 + $0x8] sm:$0xff]
    %v764 = vld [vmem:[%s7 + $0x10] sm:$0xff]
    %v765 = vld [vmem:[%s7 + $0x18] sm:$0xff]
    %v766 = vld [vmem:[%s8] sm:$0xff]
    %v767 = vld [vmem:[%s8 + $0x8] sm:$0xff]
    %v768 = vld [vmem:[%s8 + $0x10] sm:$0xff]
    %v769 = vld [vmem:[%s8 + $0x18] sm:$0xff]
    %v771 = vsel %vm325, %v762, 0
    %v774 = vsel %vm325, %v763, 0
    %v777 = vsel %vm325, %v764, 0
    %v780 = vsel %vm325, %v765, 0
    %782 = vmatprep.subr.mxu0 0.0
    %783 = vmatpush1.msra.mxu0 0.0
    %784 = vmatprep.subr.mxu0 0.0
    %785 = vmatpush1.msra.mxu0 0.0
    %786 = vmatprep.subr.mxu0 0.0
    %787 = vmatpush1.msra.mxu0 0.0
    %788 = vmatprep.subr.mxu0 0.0
    %789 = vmatpush1.msra.mxu0 0.0
    %790 = vmatprep.subr.mxu0 0.0
    %791 = vmatpush1.msra.mxu0 0.0
    %792 = vmatprep.subr.mxu0 0.0
    %793 = vmatpush1.msra.mxu0 0.0
    %794 = vmatprep.subr.mxu0 0.0
    %795 = vmatpush1.msra.mxu0 0.0
    %796 = vmatprep.subr.mxu0 0.0
    %797 = vmatpush1.msra.mxu0 0.0
    %798 = vmatprep.subr.mxu0 0.0
    %799 = vmatpush1.msra.mxu0 0.0
    %800 = vmatprep.subr.mxu0 0.0
    %801 = vmatpush1.msra.mxu0 0.0
    %802 = vmatprep.subr.mxu0 0.0
    %803 = vmatpush1.msra.mxu0 0.0
    %804 = vmatprep.subr.mxu0 0.0
    %805 = vmatpush1.msra.mxu0 0.0
    %806 = vmatprep.subr.mxu0 0.0
    %807 = vmatpush1.msra.mxu0 %v523
    %808 = vmatprep.subr.mxu0 0.0
    %809 = vmatpush1.msra.mxu0 %v522
    %810 = vmatprep.subr.mxu0 0.0
    %811 = vmatpush1.msra.mxu0 %v521
    %812 = vmatprep.subr.mxu0 0.0
    %813 = vmatpush1.msra.mxu0 %v520
    %814 = vmatprep.subr.mxu0 0.0
    %815 = vmatpush2.msra.mxu0 0.0
    %816 = vmatprep.subr.mxu0 0.0
    %817 = vmatpush2.msra.mxu0 0.0
    %818 = vmatprep.subr.mxu0 0.0
    %819 = vmatpush2.msra.mxu0 0.0
    %820 = vmatprep.subr.mxu0 0.0
    %821 = vmatpush2.msra.mxu0 0.0
    %822 = vmatprep.subr.mxu0 0.0
    %823 = vmatpush2.msra.mxu0 0.0
    %824 = vmatprep.subr.mxu0 0.0
    %825 = vmatpush2.msra.mxu0 0.0
    %826 = vmatprep.subr.mxu0 0.0
    %827 = vmatpush2.msra.mxu0 0.0
    %828 = vmatprep.subr.mxu0 0.0
    %829 = vmatpush2.msra.mxu0 0.0
    %830 = vmatprep.subr.mxu0 0.0
    %831 = vmatpush2.msra.mxu0 0.0
    %832 = vmatprep.subr.mxu0 0.0
    %833 = vmatpush2.msra.mxu0 0.0
    %834 = vmatprep.subr.mxu0 0.0
    %835 = vmatpush2.msra.mxu0 0.0
    %836 = vmatprep.subr.mxu0 0.0
    %837 = vmatpush2.msra.mxu0 0.0
    %838 = vmatprep.subr.mxu0 0.0
    %839 = vmatpush2.msra.mxu0 0.0
    %840 = vmatprep.subr.mxu0 0.0
    %841 = vmatpush2.msra.mxu0 0.0
    %842 = vmatprep.subr.mxu0 0.0
    %843 = vmatpush2.msra.mxu0 0.0
    %844 = vmatprep.subr.mxu0 0.0
    %845 = vmatpush2.msra.mxu0 0.0
    %846 = vmatprep.mubr.f32.mxu0 0.0
    %847 = vmatmul.mubr.f32.gmra.mxu0 %v771
    %v848 = vpop.f32.mrf.mxu0
    %v849 = vadd.f32 %v766, %v848
    %v850 = vpop.f32.mrf.mxu0
    %851 = vmatprep.mubr.f32.mxu0 0.0
    %852 = vmatmul.mubr.f32.gmra.mxu0 %v774
    %v853 = vpop.f32.mrf.mxu0
    %v854 = vadd.f32 %v767, %v853
    %v855 = vpop.f32.mrf.mxu0
    %856 = vmatprep.mubr.f32.mxu0 0.0
    %857 = vmatmul.mubr.f32.gmra.mxu0 %v777
    %v858 = vpop.f32.mrf.mxu0
    %v859 = vadd.f32 %v768, %v858
    %v860 = vpop.f32.mrf.mxu0
    %861 = vmatprep.mubr.f32.mxu0 0.0
    %862 = vmatmul.mubr.f32.gmra.mxu0 %v780
    %v863 = vpop.f32.mrf.mxu0
    %v864 = vadd.f32 %v769, %v863
    %v865 = vpop.f32.mrf.mxu0
    %866 = vdwg.mxu0
    %v867 = vmax.f32 %v849, 0.0
    %v868 = vmax.f32 %v854, 0.0
    %v869 = vmax.f32 %v859, 0.0
    %v870 = vmax.f32 %v864, 0.0
    %v871 = vld [vmem:[#allocation2] sm:$0xff]
    %v872 = vld [vmem:[#allocation2 + $0x8] sm:$0xff]
    %v873 = vld [vmem:[#allocation2 + $0x10] sm:$0xff]
    %v874 = vld [vmem:[#allocation2 + $0x18] sm:$0xff]
    %v875 = vld [vmem:[%s10] sm:$0xff]
    %v876 = vld [vmem:[%s10 + $0x8] sm:$0xff]
    %v877 = vld [vmem:[%s10 + $0x10] sm:$0xff]
    %v878 = vld [vmem:[%s10 + $0x18] sm:$0xff]
    %v880 = vsel %vm325, %v871, 0
    %v883 = vsel %vm325, %v872, 0
    %v886 = vsel %vm325, %v873, 0
    %v889 = vsel %vm325, %v874, 0
    %891 = vmatprep.subr.mxu0 0.0
    %892 = vmatpush1.msra.mxu0 0.0
    %893 = vmatprep.subr.mxu0 0.0
    %894 = vmatpush1.msra.mxu0 0.0
    %895 = vmatprep.subr.mxu0 0.0
    %896 = vmatpush1.msra.mxu0 0.0
    %897 = vmatprep.subr.mxu0 0.0
    %898 = vmatpush1.msra.mxu0 0.0
    %899 = vmatprep.subr.mxu0 0.0
    %900 = vmatpush1.msra.mxu0 0.0
    %901 = vmatprep.subr.mxu0 0.0
    %902 = vmatpush1.msra.mxu0 0.0
    %903 = vmatprep.subr.mxu0 0.0
    %904 = vmatpush1.msra.mxu0 0.0
    %905 = vmatprep.subr.mxu0 0.0
    %906 = vmatpush1.msra.mxu0 0.0
    %907 = vmatprep.subr.mxu0 0.0
    %908 = vmatpush1.msra.mxu0 0.0
    %909 = vmatprep.subr.mxu0 0.0
    %910 = vmatpush1.msra.mxu0 0.0
    %911 = vmatprep.subr.mxu0 0.0
    %912 = vmatpush1.msra.mxu0 0.0
    %913 = vmatprep.subr.mxu0 0.0
    %914 = vmatpush1.msra.mxu0 0.0
    %915 = vmatprep.subr.mxu0 0.0
    %916 = vmatpush1.msra.mxu0 %v870
    %917 = vmatprep.subr.mxu0 0.0
    %918 = vmatpush1.msra.mxu0 %v869
    %919 = vmatprep.subr.mxu0 0.0
    %920 = vmatpush1.msra.mxu0 %v868
    %921 = vmatprep.subr.mxu0 0.0
    %922 = vmatpush1.msra.mxu0 %v867
    %923 = vmatprep.subr.mxu0 0.0
    %924 = vmatpush2.msra.mxu0 0.0
    %925 = vmatprep.subr.mxu0 0.0
    %926 = vmatpush2.msra.mxu0 0.0
    %927 = vmatprep.subr.mxu0 0.0
    %928 = vmatpush2.msra.mxu0 0.0
    %929 = vmatprep.subr.mxu0 0.0
    %930 = vmatpush2.msra.mxu0 0.0
    %931 = vmatprep.subr.mxu0 0.0
    %932 = vmatpush2.msra.mxu0 0.0
    %933 = vmatprep.subr.mxu0 0.0
    %934 = vmatpush2.msra.mxu0 0.0
    %935 = vmatprep.subr.mxu0 0.0
    %936 = vmatpush2.msra.mxu0 0.0
    %937 = vmatprep.subr.mxu0 0.0
    %938 = vmatpush2.msra.mxu0 0.0
    %939 = vmatprep.subr.mxu0 0.0
    %940 = vmatpush2.msra.mxu0 0.0
    %941 = vmatprep.subr.mxu0 0.0
    %942 = vmatpush2.msra.mxu0 0.0
    %943 = vmatprep.subr.mxu0 0.0
    %944 = vmatpush2.msra.mxu0 0.0
    %945 = vmatprep.subr.mxu0 0.0
    %946 = vmatpush2.msra.mxu0 0.0
    %947 = vmatprep.subr.mxu0 0.0
    %948 = vmatpush2.msra.mxu0 0.0
    %949 = vmatprep.subr.mxu0 0.0
    %950 = vmatpush2.msra.mxu0 0.0
    %951 = vmatprep.subr.mxu0 0.0
    %952 = vmatpush2.msra.mxu0 0.0
    %953 = vmatprep.subr.mxu0 0.0
    %954 = vmatpush2.msra.mxu0 0.0
    %955 = vmatprep.mubr.f32.mxu0 0.0
    %956 = vmatmul.mubr.f32.gmra.mxu0 %v880
    %v957 = vpop.f32.mrf.mxu0
    %v958 = vadd.f32 %v875, %v957
    %v959 = vpop.f32.mrf.mxu0
    %960 = vmatprep.mubr.f32.mxu0 0.0
    %961 = vmatmul.mubr.f32.gmra.mxu0 %v883
    %v962 = vpop.f32.mrf.mxu0
    %v963 = vadd.f32 %v876, %v962
    %v964 = vpop.f32.mrf.mxu0
    %965 = vmatprep.mubr.f32.mxu0 0.0
    %966 = vmatmul.mubr.f32.gmra.mxu0 %v886
    %v967 = vpop.f32.mrf.mxu0
    %v968 = vadd.f32 %v877, %v967
    %v969 = vpop.f32.mrf.mxu0
    %970 = vmatprep.mubr.f32.mxu0 0.0
    %971 = vmatmul.mubr.f32.gmra.mxu0 %v889
    %v972 = vpop.f32.mrf.mxu0
    %v973 = vadd.f32 %v878, %v972
    %v974 = vpop.f32.mrf.mxu0
    %975 = vdwg.mxu0
    %v976 = vsub.f32 0.0, %v958
    %v977 = vsub.f32 0.0, %v963
    %v978 = vsub.f32 0.0, %v968
    %v979 = vsub.f32 0.0, %v973
    %v980 = vmul.f32 %v976, 1.442695
    %v981 = vpow.pop %v980
    %v982 = vmul.f32 %v977, 1.442695
    %v983 = vpow.pop %v982
    %v984 = vmul.f32 %v978, 1.442695
    %v985 = vpow.pop %v984
    %v986 = vmul.f32 %v979, 1.442695
    %v987 = vpow.pop %v986
    %v988 = vadd.f32 %v981, 1.0
    %v989 = vadd.f32 %v983, 1.0
    %v990 = vadd.f32 %v985, 1.0
    %v991 = vadd.f32 %v987, 1.0
    %v992 = vrcp.pop %v988
    %v993 = vmul.f32 1.0, %v992
    %v994 = vrcp.pop %v989
    %v995 = vmul.f32 1.0, %v994
    %v996 = vrcp.pop %v990
    %v997 = vmul.f32 1.0, %v996
    %v998 = vrcp.pop %v991
    %v999 = vmul.f32 1.0, %v998
    %1001 = vset.pattern.permute.xlu0 0
    %1002 = vperm.xlu0 %1001, %v755
    %v1003 = vpop.permute.xlu0 %1002
    %1006 = vset.pattern.permute.xlu0 0
    %1007 = vperm.xlu0 %1006, %v757
    %v1008 = vpop.permute.xlu0 %1007
    %1011 = vset.pattern.permute.xlu0 0
    %1012 = vperm.xlu0 %1011, %v759
    %v1013 = vpop.permute.xlu0 %1012
    %1016 = vset.pattern.permute.xlu0 0
    %1017 = vperm.xlu0 %1016, %v761
    %v1018 = vpop.permute.xlu0 %1017
    %v1020 = vmul.f32 %v1003, %v351
    %v1021 = vmul.f32 %v1003, %v379
    %v1022 = vmul.f32 %v1008, %v352
    %v1023 = vmul.f32 %v1008, %v380
    %v1024 = vmul.f32 %v1013, %v353
    %v1025 = vmul.f32 %v1013, %v381
    %v1026 = vmul.f32 %v1018, %v354
    %v1027 = vmul.f32 %v1018, %v382
    %v1028 = vadd.f32 %v499, %v1020
    %v1029 = vadd.f32 %v500, %v1021
    %v1030 = vadd.f32 %v501, %v1022
    %v1031 = vadd.f32 %v502, %v1023
    %v1032 = vadd.f32 %v503, %v1024
    %v1033 = vadd.f32 %v504, %v1025
    %v1034 = vadd.f32 %v505, %v1026
    %v1035 = vadd.f32 %v506, %v1027
    %1037 = vset.pattern.permute.xlu0 0
    %1038 = vperm.xlu0 %1037, %v993
    %v1039 = vpop.permute.xlu0 %1038
    %1042 = vset.pattern.permute.xlu0 0
    %1043 = vperm.xlu0 %1042, %v995
    %v1044 = vpop.permute.xlu0 %1043
    %1047 = vset.pattern.permute.xlu0 0
    %1048 = vperm.xlu0 %1047, %v997
    %v1049 = vpop.permute.xlu0 %1048
    %1052 = vset.pattern.permute.xlu0 0
    %1053 = vperm.xlu0 %1052, %v999
    %v1054 = vpop.permute.xlu0 %1053
    %v1056 = vmul.f32 %v1039, %v495
    %v1057 = vmul.f32 %v1044, %v496
    %v1058 = vmul.f32 %v1049, %v497
    %v1059 = vmul.f32 %v1054, %v498
    %v1060 = vadd.f32 %v1028, %v1056
    %v1061 = vadd.f32 %v1029, %v1056
    %v1062 = vadd.f32 %v1030, %v1057
    %v1063 = vadd.f32 %v1031, %v1057
    %v1064 = vadd.f32 %v1032, %v1058
    %v1065 = vadd.f32 %v1033, %v1058
    %v1066 = vadd.f32 %v1034, %v1059
    %v1067 = vadd.f32 %v1035, %v1059
    %1068 = vxpose.xlu0.b32.start [1/16] %v1060, 128
    %1069 = vxpose.xlu0.b32.cont [2/16] %v1062, 128
    %1070 = vxpose.xlu0.b32.cont [3/16] %v1064, 128
    %1071 = vxpose.xlu0.b32.cont [4/16] %v1066, 128
    %1072 = vxpose.xlu0.b32.cont [5/16] 0.0, 128
    %1073 = vxpose.xlu0.b32.cont [6/16] 0.0, 128
    %1074 = vxpose.xlu0.b32.cont [7/16] 0.0, 128
    %1075 = vxpose.xlu0.b32.cont [8/16] 0.0, 128
    %1076 = vxpose.xlu0.b32.cont [9/16] 0.0, 128
    %1077 = vxpose.xlu0.b32.cont [10/16] 0.0, 128
    %1078 = vxpose.xlu0.b32.cont [11/16] 0.0, 128
    %1079 = vxpose.xlu0.b32.cont [12/16] 0.0, 128
    %1080 = vxpose.xlu0.b32.cont [13/16] 0.0, 128
    %1081 = vxpose.xlu0.b32.cont [14/16] 0.0, 128
    %1082 = vxpose.xlu0.b32.cont [15/16] 0.0, 128
    %1083 = vxpose.xlu0.b32.end [16/16] 0.0, 128
    %v1084 = vpop.trf.xlu0
    %v1085 = vpop.trf.xlu0
    %v1086 = vpop.trf.xlu0
    %v1087 = vpop.trf.xlu0
    %v1088 = vpop.trf.xlu0
    %v1089 = vpop.trf.xlu0
    %v1090 = vpop.trf.xlu0
    %v1091 = vpop.trf.xlu0
    %v1092 = vpop.trf.xlu0
    %v1093 = vpop.trf.xlu0
    %v1094 = vpop.trf.xlu0
    %v1095 = vpop.trf.xlu0
    %v1096 = vpop.trf.xlu0
    %v1097 = vpop.trf.xlu0
    %v1098 = vpop.trf.xlu0
    %v1099 = vpop.trf.xlu0
    %1100 = vxpose.xlu0.b32.start [1/16] %v1061, 128
    %1101 = vxpose.xlu0.b32.cont [2/16] %v1063, 128
    %1102 = vxpose.xlu0.b32.cont [3/16] %v1065, 128
    %1103 = vxpose.xlu0.b32.cont [4/16] %v1067, 128
    %1104 = vxpose.xlu0.b32.cont [5/16] 0.0, 128
    %1105 = vxpose.xlu0.b32.cont [6/16] 0.0, 128
    %1106 = vxpose.xlu0.b32.cont [7/16] 0.0, 128
    %1107 = vxpose.xlu0.b32.cont [8/16] 0.0, 128
    %1108 = vxpose.xlu0.b32.cont [9/16] 0.0, 128
    %1109 = vxpose.xlu0.b32.cont [10/16] 0.0, 128
    %1110 = vxpose.xlu0.b32.cont [11/16] 0.0, 128
    %1111 = vxpose.xlu0.b32.cont [12/16] 0.0, 128
    %1112 = vxpose.xlu0.b32.cont [13/16] 0.0, 128
    %1113 = vxpose.xlu0.b32.cont [14/16] 0.0, 128
    %1114 = vxpose.xlu0.b32.cont [15/16] 0.0, 128
    %1115 = vxpose.xlu0.b32.end [16/16] 0.0, 128
    %v1116 = vpop.trf.xlu0
    %v1117 = vpop.trf.xlu0
    %v1118 = vpop.trf.xlu0
    %v1119 = vpop.trf.xlu0
    %v1120 = vpop.trf.xlu0
    %v1121 = vpop.trf.xlu0
    %v1122 = vpop.trf.xlu0
    %v1123 = vpop.trf.xlu0
    %v1124 = vpop.trf.xlu0
    %v1125 = vpop.trf.xlu0
    %v1126 = vpop.trf.xlu0
    %v1127 = vpop.trf.xlu0
    %v1128 = vpop.trf.xlu0
    %v1129 = vpop.trf.xlu0
    %v1130 = vpop.trf.xlu0
    %v1131 = vpop.trf.xlu0
    %1132 = vst.msk [vmem:[%s11] sm:$0xff] %vm325, %v1084
    %1133 = vst.msk [vmem:[%s11 + $0x8] sm:$0xff] %vm325, %v1085
    %1134 = vst.msk [vmem:[%s11 + $0x10] sm:$0xff] %vm325, %v1086
    %1135 = vst.msk [vmem:[%s11 + $0x18] sm:$0xff] %vm325, %v1087
    %1136 = vst.msk [vmem:[%s11 + $0x20] sm:$0xff] %vm325, %v1088
    %1137 = vst.msk [vmem:[%s11 + $0x28] sm:$0xff] %vm325, %v1089
    %1138 = vst.msk [vmem:[%s11 + $0x30] sm:$0xff] %vm325, %v1090
    %1139 = vst.msk [vmem:[%s11 + $0x38] sm:$0xff] %vm325, %v1091
    %1140 = vst.msk [vmem:[%s11 + $0x40] sm:$0xff] %vm325, %v1092
    %1141 = vst.msk [vmem:[%s11 + $0x48] sm:$0xff] %vm325, %v1093
    %1142 = vst.msk [vmem:[%s11 + $0x50] sm:$0xff] %vm325, %v1094
    %1143 = vst.msk [vmem:[%s11 + $0x58] sm:$0xff] %vm325, %v1095
    %1144 = vst.msk [vmem:[%s11 + $0x60] sm:$0xff] %vm325, %v1096
    %1145 = vst.msk [vmem:[%s11 + $0x68] sm:$0xff] %vm325, %v1097
    %1146 = vst.msk [vmem:[%s11 + $0x70] sm:$0xff] %vm325, %v1098
    %1147 = vst.msk [vmem:[%s11 + $0x78] sm:$0xff] %vm325, %v1099
    %1148 = vst.msk [vmem:[%s11 + $0x80] sm:$0xff] %vm325, %v1116
    %1149 = vst.msk [vmem:[%s11 + $0x88] sm:$0xff] %vm325, %v1117
    %1150 = vst.msk [vmem:[%s11 + $0x90] sm:$0xff] %vm325, %v1118
    %1151 = vst.msk [vmem:[%s11 + $0x98] sm:$0xff] %vm325, %v1119
    %1152 = vst.msk [vmem:[%s11 + $0xa0] sm:$0xff] %vm325, %v1120
    %1153 = vst.msk [vmem:[%s11 + $0xa8] sm:$0xff] %vm325, %v1121
    %1154 = vst.msk [vmem:[%s11 + $0xb0] sm:$0xff] %vm325, %v1122
    %1155 = vst.msk [vmem:[%s11 + $0xb8] sm:$0xff] %vm325, %v1123
    %1156 = vst.msk [vmem:[%s11 + $0xc0] sm:$0xff] %vm325, %v1124
    %1157 = vst.msk [vmem:[%s11 + $0xc8] sm:$0xff] %vm325, %v1125
    %1158 = vst.msk [vmem:[%s11 + $0xd0] sm:$0xff] %vm325, %v1126
    %1159 = vst.msk [vmem:[%s11 + $0xd8] sm:$0xff] %vm325, %v1127
    %1160 = vst.msk [vmem:[%s11 + $0xe0] sm:$0xff] %vm325, %v1128
    %1161 = vst.msk [vmem:[%s11 + $0xe8] sm:$0xff] %vm325, %v1129
    %1162 = vst.msk [vmem:[%s11 + $0xf0] sm:$0xff] %vm325, %v1130
    %1163 = vst.msk [vmem:[%s11 + $0xf8] sm:$0xff] %vm325, %v1131
    %s1164 = scalar_lea.vmem %s0, 64
    %v1165 = vld [vmem:[%s1164] sm:$0xff]
    %v1166 = vld [vmem:[%s1164 + $0x8] sm:$0xff]
    %v1167 = vld [vmem:[%s1164 + $0x10] sm:$0xff]
    %v1168 = vld [vmem:[%s1164 + $0x18] sm:$0xff]
    %v1169 = vld [vmem:[%s1164 + $0x20] sm:$0xff]
    %v1170 = vld [vmem:[%s1164 + $0x28] sm:$0xff]
    %v1171 = vld [vmem:[%s1164 + $0x30] sm:$0xff]
    %v1172 = vld [vmem:[%s1164 + $0x38] sm:$0xff]
    %v1173 = vadd.f32 %v1165, %v1166
    %1174 = vadd.xlane.f32.xlu0 %v1173
    %v1175 = vpop.xlane.xlu0 %1174
    %v1176 = vadd.f32 %v1167, %v1168
    %1177 = vadd.xlane.f32.xlu0 %v1176
    %v1178 = vpop.xlane.xlu0 %1177
    %v1179 = vadd.f32 %v1169, %v1170
    %1180 = vadd.xlane.f32.xlu0 %v1179
    %v1181 = vpop.xlane.xlu0 %1180
    %v1182 = vadd.f32 %v1171, %v1172
    %1183 = vadd.xlane.f32.xlu0 %v1182
    %v1184 = vpop.xlane.xlu0 %1183
    %v1185 = vmul.f32 %v1175, %v519
    %v1186 = vmul.f32 %v1178, %v519
    %v1187 = vmul.f32 %v1181, %v519
    %v1188 = vmul.f32 %v1184, %v519
    %v1189 = vld [vmem:[%s3] sm:$0xff]
    %v1190 = vld [vmem:[%s3 + $0x8] sm:$0xff]
    %v1191 = vld [vmem:[%s3 + $0x10] sm:$0xff]
    %v1192 = vld [vmem:[%s3 + $0x18] sm:$0xff]
    %v1193 = vld [vmem:[%s4] sm:$0xff]
    %v1194 = vld [vmem:[%s4 + $0x8] sm:$0xff]
    %v1195 = vld [vmem:[%s4 + $0x10] sm:$0xff]
    %v1196 = vld [vmem:[%s4 + $0x18] sm:$0xff]
    %v1198 = vsel %vm325, %v1189, 0
    %v1201 = vsel %vm325, %v1190, 0
    %v1204 = vsel %vm325, %v1191, 0
    %v1207 = vsel %vm325, %v1192, 0
    %1209 = vmatprep.subr.mxu0 0.0
    %1210 = vmatpush1.msra.mxu0 0.0
    %1211 = vmatprep.subr.mxu0 0.0
    %1212 = vmatpush1.msra.mxu0 0.0
    %1213 = vmatprep.subr.mxu0 0.0
    %1214 = vmatpush1.msra.mxu0 0.0
    %1215 = vmatprep.subr.mxu0 0.0
    %1216 = vmatpush1.msra.mxu0 0.0
    %1217 = vmatprep.subr.mxu0 0.0
    %1218 = vmatpush1.msra.mxu0 0.0
    %1219 = vmatprep.subr.mxu0 0.0
    %1220 = vmatpush1.msra.mxu0 0.0
    %1221 = vmatprep.subr.mxu0 0.0
    %1222 = vmatpush1.msra.mxu0 0.0
    %1223 = vmatprep.subr.mxu0 0.0
    %1224 = vmatpush1.msra.mxu0 0.0
    %1225 = vmatprep.subr.mxu0 0.0
    %1226 = vmatpush1.msra.mxu0 0.0
    %1227 = vmatprep.subr.mxu0 0.0
    %1228 = vmatpush1.msra.mxu0 0.0
    %1229 = vmatprep.subr.mxu0 0.0
    %1230 = vmatpush1.msra.mxu0 0.0
    %1231 = vmatprep.subr.mxu0 0.0
    %1232 = vmatpush1.msra.mxu0 0.0
    %1233 = vmatprep.subr.mxu0 0.0
    %1234 = vmatpush1.msra.mxu0 %v1188
    %1235 = vmatprep.subr.mxu0 0.0
    %1236 = vmatpush1.msra.mxu0 %v1187
    %1237 = vmatprep.subr.mxu0 0.0
    %1238 = vmatpush1.msra.mxu0 %v1186
    %1239 = vmatprep.subr.mxu0 0.0
    %1240 = vmatpush1.msra.mxu0 %v1185
    %1241 = vmatprep.subr.mxu0 0.0
    %1242 = vmatpush2.msra.mxu0 0.0
    %1243 = vmatprep.subr.mxu0 0.0
    %1244 = vmatpush2.msra.mxu0 0.0
    %1245 = vmatprep.subr.mxu0 0.0
    %1246 = vmatpush2.msra.mxu0 0.0
    %1247 = vmatprep.subr.mxu0 0.0
    %1248 = vmatpush2.msra.mxu0 0.0
    %1249 = vmatprep.subr.mxu0 0.0
    %1250 = vmatpush2.msra.mxu0 0.0
    %1251 = vmatprep.subr.mxu0 0.0
    %1252 = vmatpush2.msra.mxu0 0.0
    %1253 = vmatprep.subr.mxu0 0.0
    %1254 = vmatpush2.msra.mxu0 0.0
    %1255 = vmatprep.subr.mxu0 0.0
    %1256 = vmatpush2.msra.mxu0 0.0
    %1257 = vmatprep.subr.mxu0 0.0
    %1258 = vmatpush2.msra.mxu0 0.0
    %1259 = vmatprep.subr.mxu0 0.0
    %1260 = vmatpush2.msra.mxu0 0.0
    %1261 = vmatprep.subr.mxu0 0.0
    %1262 = vmatpush2.msra.mxu0 0.0
    %1263 = vmatprep.subr.mxu0 0.0
    %1264 = vmatpush2.msra.mxu0 0.0
    %1265 = vmatprep.subr.mxu0 0.0
    %1266 = vmatpush2.msra.mxu0 0.0
    %1267 = vmatprep.subr.mxu0 0.0
    %1268 = vmatpush2.msra.mxu0 0.0
    %1269 = vmatprep.subr.mxu0 0.0
    %1270 = vmatpush2.msra.mxu0 0.0
    %1271 = vmatprep.subr.mxu0 0.0
    %1272 = vmatpush2.msra.mxu0 0.0
    %1273 = vmatprep.mubr.f32.mxu0 0.0
    %1274 = vmatmul.mubr.f32.gmra.mxu0 %v1198
    %v1275 = vpop.f32.mrf.mxu0
    %v1276 = vadd.f32 %v1193, %v1275
    %v1277 = vpop.f32.mrf.mxu0
    %1278 = vmatprep.mubr.f32.mxu0 0.0
    %1279 = vmatmul.mubr.f32.gmra.mxu0 %v1201
    %v1280 = vpop.f32.mrf.mxu0
    %v1281 = vadd.f32 %v1194, %v1280
    %v1282 = vpop.f32.mrf.mxu0
    %1283 = vmatprep.mubr.f32.mxu0 0.0
    %1284 = vmatmul.mubr.f32.gmra.mxu0 %v1204
    %v1285 = vpop.f32.mrf.mxu0
    %v1286 = vadd.f32 %v1195, %v1285
    %v1287 = vpop.f32.mrf.mxu0
    %1288 = vmatprep.mubr.f32.mxu0 0.0
    %1289 = vmatmul.mubr.f32.gmra.mxu0 %v1207
    %v1290 = vpop.f32.mrf.mxu0
    %v1291 = vadd.f32 %v1196, %v1290
    %v1292 = vpop.f32.mrf.mxu0
    %1293 = vdwg.mxu0
    %v1294 = vmax.f32 %v1276, 0.0
    %v1295 = vmax.f32 %v1281, 0.0
    %v1296 = vmax.f32 %v1286, 0.0
    %v1297 = vmax.f32 %v1291, 0.0
    %v1298 = vld [vmem:[%s5] sm:$0xff]
    %v1299 = vld [vmem:[%s5 + $0x8] sm:$0xff]
    %v1300 = vld [vmem:[%s5 + $0x10] sm:$0xff]
    %v1301 = vld [vmem:[%s5 + $0x18] sm:$0xff]
    %v1302 = vld [vmem:[%s6] sm:$0xff]
    %v1303 = vld [vmem:[%s6 + $0x8] sm:$0xff]
    %v1304 = vld [vmem:[%s6 + $0x10] sm:$0xff]
    %v1305 = vld [vmem:[%s6 + $0x18] sm:$0xff]
    %v1307 = vsel %vm325, %v1298, 0
    %v1310 = vsel %vm325, %v1299, 0
    %v1313 = vsel %vm325, %v1300, 0
    %v1316 = vsel %vm325, %v1301, 0
    %1318 = vmatprep.subr.mxu0 0.0
    %1319 = vmatpush1.msra.mxu0 0.0
    %1320 = vmatprep.subr.mxu0 0.0
    %1321 = vmatpush1.msra.mxu0 0.0
    %1322 = vmatprep.subr.mxu0 0.0
    %1323 = vmatpush1.msra.mxu0 0.0
    %1324 = vmatprep.subr.mxu0 0.0
    %1325 = vmatpush1.msra.mxu0 0.0
    %1326 = vmatprep.subr.mxu0 0.0
    %1327 = vmatpush1.msra.mxu0 0.0
    %1328 = vmatprep.subr.mxu0 0.0
    %1329 = vmatpush1.msra.mxu0 0.0
    %1330 = vmatprep.subr.mxu0 0.0
    %1331 = vmatpush1.msra.mxu0 0.0
    %1332 = vmatprep.subr.mxu0 0.0
    %1333 = vmatpush1.msra.mxu0 0.0
    %1334 = vmatprep.subr.mxu0 0.0
    %1335 = vmatpush1.msra.mxu0 0.0
    %1336 = vmatprep.subr.mxu0 0.0
    %1337 = vmatpush1.msra.mxu0 0.0
    %1338 = vmatprep.subr.mxu0 0.0
    %1339 = vmatpush1.msra.mxu0 0.0
    %1340 = vmatprep.subr.mxu0 0.0
    %1341 = vmatpush1.msra.mxu0 0.0
    %1342 = vmatprep.subr.mxu0 0.0
    %1343 = vmatpush1.msra.mxu0 %v1297
    %1344 = vmatprep.subr.mxu0 0.0
    %1345 = vmatpush1.msra.mxu0 %v1296
    %1346 = vmatprep.subr.mxu0 0.0
    %1347 = vmatpush1.msra.mxu0 %v1295
    %1348 = vmatprep.subr.mxu0 0.0
    %1349 = vmatpush1.msra.mxu0 %v1294
    %1350 = vmatprep.subr.mxu0 0.0
    %1351 = vmatpush2.msra.mxu0 0.0
    %1352 = vmatprep.subr.mxu0 0.0
    %1353 = vmatpush2.msra.mxu0 0.0
    %1354 = vmatprep.subr.mxu0 0.0
    %1355 = vmatpush2.msra.mxu0 0.0
    %1356 = vmatprep.subr.mxu0 0.0
    %1357 = vmatpush2.msra.mxu0 0.0
    %1358 = vmatprep.subr.mxu0 0.0
    %1359 = vmatpush2.msra.mxu0 0.0
    %1360 = vmatprep.subr.mxu0 0.0
    %1361 = vmatpush2.msra.mxu0 0.0
    %1362 = vmatprep.subr.mxu0 0.0
    %1363 = vmatpush2.msra.mxu0 0.0
    %1364 = vmatprep.subr.mxu0 0.0
    %1365 = vmatpush2.msra.mxu0 0.0
    %1366 = vmatprep.subr.mxu0 0.0
    %1367 = vmatpush2.msra.mxu0 0.0
    %1368 = vmatprep.subr.mxu0 0.0
    %1369 = vmatpush2.msra.mxu0 0.0
    %1370 = vmatprep.subr.mxu0 0.0
    %1371 = vmatpush2.msra.mxu0 0.0
    %1372 = vmatprep.subr.mxu0 0.0
    %1373 = vmatpush2.msra.mxu0 0.0
    %1374 = vmatprep.subr.mxu0 0.0
    %1375 = vmatpush2.msra.mxu0 0.0
    %1376 = vmatprep.subr.mxu0 0.0
    %1377 = vmatpush2.msra.mxu0 0.0
    %1378 = vmatprep.subr.mxu0 0.0
    %1379 = vmatpush2.msra.mxu0 0.0
    %1380 = vmatprep.subr.mxu0 0.0
    %1381 = vmatpush2.msra.mxu0 0.0
    %1382 = vmatprep.mubr.f32.mxu0 0.0
    %1383 = vmatmul.mubr.f32.gmra.mxu0 %v1307
    %v1384 = vpop.f32.mrf.mxu0
    %v1385 = vadd.f32 %v1302, %v1384
    %v1386 = vpop.f32.mrf.mxu0
    %1387 = vmatprep.mubr.f32.mxu0 0.0
    %1388 = vmatmul.mubr.f32.gmra.mxu0 %v1310
    %v1389 = vpop.f32.mrf.mxu0
    %v1390 = vadd.f32 %v1303, %v1389
    %v1391 = vpop.f32.mrf.mxu0
    %1392 = vmatprep.mubr.f32.mxu0 0.0
    %1393 = vmatmul.mubr.f32.gmra.mxu0 %v1313
    %v1394 = vpop.f32.mrf.mxu0
    %v1395 = vadd.f32 %v1304, %v1394
    %v1396 = vpop.f32.mrf.mxu0
    %1397 = vmatprep.mubr.f32.mxu0 0.0
    %1398 = vmatmul.mubr.f32.gmra.mxu0 %v1316
    %v1399 = vpop.f32.mrf.mxu0
    %v1400 = vadd.f32 %v1305, %v1399
    %v1401 = vpop.f32.mrf.mxu0
    %1402 = vdwg.mxu0
    %v1403 = vsub.f32 0.0, %v1385
    %v1404 = vsub.f32 0.0, %v1390
    %v1405 = vsub.f32 0.0, %v1395
    %v1406 = vsub.f32 0.0, %v1400
    %v1407 = vmul.f32 %v1403, 1.442695
    %v1408 = vpow.pop %v1407
    %v1409 = vmul.f32 %v1404, 1.442695
    %v1410 = vpow.pop %v1409
    %v1411 = vmul.f32 %v1405, 1.442695
    %v1412 = vpow.pop %v1411
    %v1413 = vmul.f32 %v1406, 1.442695
    %v1414 = vpow.pop %v1413
    %v1415 = vadd.f32 %v1408, 1.0
    %v1416 = vadd.f32 %v1410, 1.0
    %v1417 = vadd.f32 %v1412, 1.0
    %v1418 = vadd.f32 %v1414, 1.0
    %v1419 = vrcp.pop %v1415
    %v1420 = vmul.f32 1.0, %v1419
    %v1421 = vrcp.pop %v1416
    %v1422 = vmul.f32 1.0, %v1421
    %v1423 = vrcp.pop %v1417
    %v1424 = vmul.f32 1.0, %v1423
    %v1425 = vrcp.pop %v1418
    %v1426 = vmul.f32 1.0, %v1425
    %v1427 = vld [vmem:[%s7] sm:$0xff]
    %v1428 = vld [vmem:[%s7 + $0x8] sm:$0xff]
    %v1429 = vld [vmem:[%s7 + $0x10] sm:$0xff]
    %v1430 = vld [vmem:[%s7 + $0x18] sm:$0xff]
    %v1431 = vld [vmem:[%s8] sm:$0xff]
    %v1432 = vld [vmem:[%s8 + $0x8] sm:$0xff]
    %v1433 = vld [vmem:[%s8 + $0x10] sm:$0xff]
    %v1434 = vld [vmem:[%s8 + $0x18] sm:$0xff]
    %v1436 = vsel %vm325, %v1427, 0
    %v1439 = vsel %vm325, %v1428, 0
    %v1442 = vsel %vm325, %v1429, 0
    %v1445 = vsel %vm325, %v1430, 0
    %1447 = vmatprep.subr.mxu0 0.0
    %1448 = vmatpush1.msra.mxu0 0.0
    %1449 = vmatprep.subr.mxu0 0.0
    %1450 = vmatpush1.msra.mxu0 0.0
    %1451 = vmatprep.subr.mxu0 0.0
    %1452 = vmatpush1.msra.mxu0 0.0
    %1453 = vmatprep.subr.mxu0 0.0
    %1454 = vmatpush1.msra.mxu0 0.0
    %1455 = vmatprep.subr.mxu0 0.0
    %1456 = vmatpush1.msra.mxu0 0.0
    %1457 = vmatprep.subr.mxu0 0.0
    %1458 = vmatpush1.msra.mxu0 0.0
    %1459 = vmatprep.subr.mxu0 0.0
    %1460 = vmatpush1.msra.mxu0 0.0
    %1461 = vmatprep.subr.mxu0 0.0
    %1462 = vmatpush1.msra.mxu0 0.0
    %1463 = vmatprep.subr.mxu0 0.0
    %1464 = vmatpush1.msra.mxu0 0.0
    %1465 = vmatprep.subr.mxu0 0.0
    %1466 = vmatpush1.msra.mxu0 0.0
    %1467 = vmatprep.subr.mxu0 0.0
    %1468 = vmatpush1.msra.mxu0 0.0
    %1469 = vmatprep.subr.mxu0 0.0
    %1470 = vmatpush1.msra.mxu0 0.0
    %1471 = vmatprep.subr.mxu0 0.0
    %1472 = vmatpush1.msra.mxu0 %v1188
    %1473 = vmatprep.subr.mxu0 0.0
    %1474 = vmatpush1.msra.mxu0 %v1187
    %1475 = vmatprep.subr.mxu0 0.0
    %1476 = vmatpush1.msra.mxu0 %v1186
    %1477 = vmatprep.subr.mxu0 0.0
    %1478 = vmatpush1.msra.mxu0 %v1185
    %1479 = vmatprep.subr.mxu0 0.0
    %1480 = vmatpush2.msra.mxu0 0.0
    %1481 = vmatprep.subr.mxu0 0.0
    %1482 = vmatpush2.msra.mxu0 0.0
    %1483 = vmatprep.subr.mxu0 0.0
    %1484 = vmatpush2.msra.mxu0 0.0
    %1485 = vmatprep.subr.mxu0 0.0
    %1486 = vmatpush2.msra.mxu0 0.0
    %1487 = vmatprep.subr.mxu0 0.0
    %1488 = vmatpush2.msra.mxu0 0.0
    %1489 = vmatprep.subr.mxu0 0.0
    %1490 = vmatpush2.msra.mxu0 0.0
    %1491 = vmatprep.subr.mxu0 0.0
    %1492 = vmatpush2.msra.mxu0 0.0
    %1493 = vmatprep.subr.mxu0 0.0
    %1494 = vmatpush2.msra.mxu0 0.0
    %1495 = vmatprep.subr.mxu0 0.0
    %1496 = vmatpush2.msra.mxu0 0.0
    %1497 = vmatprep.subr.mxu0 0.0
    %1498 = vmatpush2.msra.mxu0 0.0
    %1499 = vmatprep.subr.mxu0 0.0
    %1500 = vmatpush2.msra.mxu0 0.0
    %1501 = vmatprep.subr.mxu0 0.0
    %1502 = vmatpush2.msra.mxu0 0.0
    %1503 = vmatprep.subr.mxu0 0.0
    %1504 = vmatpush2.msra.mxu0 0.0
    %1505 = vmatprep.subr.mxu0 0.0
    %1506 = vmatpush2.msra.mxu0 0.0
    %1507 = vmatprep.subr.mxu0 0.0
    %1508 = vmatpush2.msra.mxu0 0.0
    %1509 = vmatprep.subr.mxu0 0.0
    %1510 = vmatpush2.msra.mxu0 0.0
    %1511 = vmatprep.mubr.f32.mxu0 0.0
    %1512 = vmatmul.mubr.f32.gmra.mxu0 %v1436
    %v1513 = vpop.f32.mrf.mxu0
    %v1514 = vadd.f32 %v1431, %v1513
    %v1515 = vpop.f32.mrf.mxu0
    %1516 = vmatprep.mubr.f32.mxu0 0.0
    %1517 = vmatmul.mubr.f32.gmra.mxu0 %v1439
    %v1518 = vpop.f32.mrf.mxu0
    %v1519 = vadd.f32 %v1432, %v1518
    %v1520 = vpop.f32.mrf.mxu0
    %1521 = vmatprep.mubr.f32.mxu0 0.0
    %1522 = vmatmul.mubr.f32.gmra.mxu0 %v1442
    %v1523 = vpop.f32.mrf.mxu0
    %v1524 = vadd.f32 %v1433, %v1523
    %v1525 = vpop.f32.mrf.mxu0
    %1526 = vmatprep.mubr.f32.mxu0 0.0
    %1527 = vmatmul.mubr.f32.gmra.mxu0 %v1445
    %v1528 = vpop.f32.mrf.mxu0
    %v1529 = vadd.f32 %v1434, %v1528
    %v1530 = vpop.f32.mrf.mxu0
    %1531 = vdwg.mxu0
    %v1532 = vmax.f32 %v1514, 0.0
    %v1533 = vmax.f32 %v1519, 0.0
    %v1534 = vmax.f32 %v1524, 0.0
    %v1535 = vmax.f32 %v1529, 0.0
    %v1536 = vld [vmem:[#allocation2] sm:$0xff]
    %v1537 = vld [vmem:[#allocation2 + $0x8] sm:$0xff]
    %v1538 = vld [vmem:[#allocation2 + $0x10] sm:$0xff]
    %v1539 = vld [vmem:[#allocation2 + $0x18] sm:$0xff]
    %v1540 = vld [vmem:[%s10] sm:$0xff]
    %v1541 = vld [vmem:[%s10 + $0x8] sm:$0xff]
    %v1542 = vld [vmem:[%s10 + $0x10] sm:$0xff]
    %v1543 = vld [vmem:[%s10 + $0x18] sm:$0xff]
    %v1545 = vsel %vm325, %v1536, 0
    %v1548 = vsel %vm325, %v1537, 0
    %v1551 = vsel %vm325, %v1538, 0
    %v1554 = vsel %vm325, %v1539, 0
    %1556 = vmatprep.subr.mxu0 0.0
    %1557 = vmatpush1.msra.mxu0 0.0
    %1558 = vmatprep.subr.mxu0 0.0
    %1559 = vmatpush1.msra.mxu0 0.0
    %1560 = vmatprep.subr.mxu0 0.0
    %1561 = vmatpush1.msra.mxu0 0.0
    %1562 = vmatprep.subr.mxu0 0.0
    %1563 = vmatpush1.msra.mxu0 0.0
    %1564 = vmatprep.subr.mxu0 0.0
    %1565 = vmatpush1.msra.mxu0 0.0
    %1566 = vmatprep.subr.mxu0 0.0
    %1567 = vmatpush1.msra.mxu0 0.0
    %1568 = vmatprep.subr.mxu0 0.0
    %1569 = vmatpush1.msra.mxu0 0.0
    %1570 = vmatprep.subr.mxu0 0.0
    %1571 = vmatpush1.msra.mxu0 0.0
    %1572 = vmatprep.subr.mxu0 0.0
    %1573 = vmatpush1.msra.mxu0 0.0
    %1574 = vmatprep.subr.mxu0 0.0
    %1575 = vmatpush1.msra.mxu0 0.0
    %1576 = vmatprep.subr.mxu0 0.0
    %1577 = vmatpush1.msra.mxu0 0.0
    %1578 = vmatprep.subr.mxu0 0.0
    %1579 = vmatpush1.msra.mxu0 0.0
    %1580 = vmatprep.subr.mxu0 0.0
    %1581 = vmatpush1.msra.mxu0 %v1535
    %1582 = vmatprep.subr.mxu0 0.0
    %1583 = vmatpush1.msra.mxu0 %v1534
    %1584 = vmatprep.subr.mxu0 0.0
    %1585 = vmatpush1.msra.mxu0 %v1533
    %1586 = vmatprep.subr.mxu0 0.0
    %1587 = vmatpush1.msra.mxu0 %v1532
    %1588 = vmatprep.subr.mxu0 0.0
    %1589 = vmatpush2.msra.mxu0 0.0
    %1590 = vmatprep.subr.mxu0 0.0
    %1591 = vmatpush2.msra.mxu0 0.0
    %1592 = vmatprep.subr.mxu0 0.0
    %1593 = vmatpush2.msra.mxu0 0.0
    %1594 = vmatprep.subr.mxu0 0.0
    %1595 = vmatpush2.msra.mxu0 0.0
    %1596 = vmatprep.subr.mxu0 0.0
    %1597 = vmatpush2.msra.mxu0 0.0
    %1598 = vmatprep.subr.mxu0 0.0
    %1599 = vmatpush2.msra.mxu0 0.0
    %1600 = vmatprep.subr.mxu0 0.0
    %1601 = vmatpush2.msra.mxu0 0.0
    %1602 = vmatprep.subr.mxu0 0.0
    %1603 = vmatpush2.msra.mxu0 0.0
    %1604 = vmatprep.subr.mxu0 0.0
    %1605 = vmatpush2.msra.mxu0 0.0
    %1606 = vmatprep.subr.mxu0 0.0
    %1607 = vmatpush2.msra.mxu0 0.0
    %1608 = vmatprep.subr.mxu0 0.0
    %1609 = vmatpush2.msra.mxu0 0.0
    %1610 = vmatprep.subr.mxu0 0.0
    %1611 = vmatpush2.msra.mxu0 0.0
    %1612 = vmatprep.subr.mxu0 0.0
    %1613 = vmatpush2.msra.mxu0 0.0
    %1614 = vmatprep.subr.mxu0 0.0
    %1615 = vmatpush2.msra.mxu0 0.0
    %1616 = vmatprep.subr.mxu0 0.0
    %1617 = vmatpush2.msra.mxu0 0.0
    %1618 = vmatprep.subr.mxu0 0.0
    %1619 = vmatpush2.msra.mxu0 0.0
    %1620 = vmatprep.mubr.f32.mxu0 0.0
    %1621 = vmatmul.mubr.f32.gmra.mxu0 %v1545
    %v1622 = vpop.f32.mrf.mxu0
    %v1623 = vadd.f32 %v1540, %v1622
    %v1624 = vpop.f32.mrf.mxu0
    %1625 = vmatprep.mubr.f32.mxu0 0.0
    %1626 = vmatmul.mubr.f32.gmra.mxu0 %v1548
    %v1627 = vpop.f32.mrf.mxu0
    %v1628 = vadd.f32 %v1541, %v1627
    %v1629 = vpop.f32.mrf.mxu0
    %1630 = vmatprep.mubr.f32.mxu0 0.0
    %1631 = vmatmul.mubr.f32.gmra.mxu0 %v1551
    %v1632 = vpop.f32.mrf.mxu0
    %v1633 = vadd.f32 %v1542, %v1632
    %v1634 = vpop.f32.mrf.mxu0
    %1635 = vmatprep.mubr.f32.mxu0 0.0
    %1636 = vmatmul.mubr.f32.gmra.mxu0 %v1554
    %v1637 = vpop.f32.mrf.mxu0
    %v1638 = vadd.f32 %v1543, %v1637
    %v1639 = vpop.f32.mrf.mxu0
    %1640 = vdwg.mxu0
    %v1641 = vsub.f32 0.0, %v1623
    %v1642 = vsub.f32 0.0, %v1628
    %v1643 = vsub.f32 0.0, %v1633
    %v1644 = vsub.f32 0.0, %v1638
    %v1645 = vmul.f32 %v1641, 1.442695
    %v1646 = vpow.pop %v1645
    %v1647 = vmul.f32 %v1642, 1.442695
    %v1648 = vpow.pop %v1647
    %v1649 = vmul.f32 %v1643, 1.442695
    %v1650 = vpow.pop %v1649
    %v1651 = vmul.f32 %v1644, 1.442695
    %v1652 = vpow.pop %v1651
    %v1653 = vadd.f32 %v1646, 1.0
    %v1654 = vadd.f32 %v1648, 1.0
    %v1655 = vadd.f32 %v1650, 1.0
    %v1656 = vadd.f32 %v1652, 1.0
    %v1657 = vrcp.pop %v1653
    %v1658 = vmul.f32 1.0, %v1657
    %v1659 = vrcp.pop %v1654
    %v1660 = vmul.f32 1.0, %v1659
    %v1661 = vrcp.pop %v1655
    %v1662 = vmul.f32 1.0, %v1661
    %v1663 = vrcp.pop %v1656
    %v1664 = vmul.f32 1.0, %v1663
    %1666 = vset.pattern.permute.xlu0 0
    %1667 = vperm.xlu0 %1666, %v1420
    %v1668 = vpop.permute.xlu0 %1667
    %1671 = vset.pattern.permute.xlu0 0
    %1672 = vperm.xlu0 %1671, %v1422
    %v1673 = vpop.permute.xlu0 %1672
    %1676 = vset.pattern.permute.xlu0 0
    %1677 = vperm.xlu0 %1676, %v1424
    %v1678 = vpop.permute.xlu0 %1677
    %1681 = vset.pattern.permute.xlu0 0
    %1682 = vperm.xlu0 %1681, %v1426
    %v1683 = vpop.permute.xlu0 %1682
    %v1685 = vmul.f32 %v1668, %v351
    %v1686 = vmul.f32 %v1668, %v379
    %v1687 = vmul.f32 %v1673, %v352
    %v1688 = vmul.f32 %v1673, %v380
    %v1689 = vmul.f32 %v1678, %v353
    %v1690 = vmul.f32 %v1678, %v381
    %v1691 = vmul.f32 %v1683, %v354
    %v1692 = vmul.f32 %v1683, %v382
    %v1693 = vadd.f32 %v1165, %v1685
    %v1694 = vadd.f32 %v1166, %v1686
    %v1695 = vadd.f32 %v1167, %v1687
    %v1696 = vadd.f32 %v1168, %v1688
    %v1697 = vadd.f32 %v1169, %v1689
    %v1698 = vadd.f32 %v1170, %v1690
    %v1699 = vadd.f32 %v1171, %v1691
    %v1700 = vadd.f32 %v1172, %v1692
    %1702 = vset.pattern.permute.xlu0 0
    %1703 = vperm.xlu0 %1702, %v1658
    %v1704 = vpop.permute.xlu0 %1703
    %1707 = vset.pattern.permute.xlu0 0
    %1708 = vperm.xlu0 %1707, %v1660
    %v1709 = vpop.permute.xlu0 %1708
    %1712 = vset.pattern.permute.xlu0 0
    %1713 = vperm.xlu0 %1712, %v1662
    %v1714 = vpop.permute.xlu0 %1713
    %1717 = vset.pattern.permute.xlu0 0
    %1718 = vperm.xlu0 %1717, %v1664
    %v1719 = vpop.permute.xlu0 %1718
    %v1721 = vmul.f32 %v1704, %v495
    %v1722 = vmul.f32 %v1709, %v496
    %v1723 = vmul.f32 %v1714, %v497
    %v1724 = vmul.f32 %v1719, %v498
    %v1725 = vadd.f32 %v1693, %v1721
    %v1726 = vadd.f32 %v1694, %v1721
    %v1727 = vadd.f32 %v1695, %v1722
    %v1728 = vadd.f32 %v1696, %v1722
    %v1729 = vadd.f32 %v1697, %v1723
    %v1730 = vadd.f32 %v1698, %v1723
    %v1731 = vadd.f32 %v1699, %v1724
    %v1732 = vadd.f32 %v1700, %v1724
    %1733 = vxpose.xlu0.b32.start [1/16] %v1725, 128
    %1734 = vxpose.xlu0.b32.cont [2/16] %v1727, 128
    %1735 = vxpose.xlu0.b32.cont [3/16] %v1729, 128
    %1736 = vxpose.xlu0.b32.cont [4/16] %v1731, 128
    %1737 = vxpose.xlu0.b32.cont [5/16] 0.0, 128
    %1738 = vxpose.xlu0.b32.cont [6/16] 0.0, 128
    %1739 = vxpose.xlu0.b32.cont [7/16] 0.0, 128
    %1740 = vxpose.xlu0.b32.cont [8/16] 0.0, 128
    %1741 = vxpose.xlu0.b32.cont [9/16] 0.0, 128
    %1742 = vxpose.xlu0.b32.cont [10/16] 0.0, 128
    %1743 = vxpose.xlu0.b32.cont [11/16] 0.0, 128
    %1744 = vxpose.xlu0.b32.cont [12/16] 0.0, 128
    %1745 = vxpose.xlu0.b32.cont [13/16] 0.0, 128
    %1746 = vxpose.xlu0.b32.cont [14/16] 0.0, 128
    %1747 = vxpose.xlu0.b32.cont [15/16] 0.0, 128
    %1748 = vxpose.xlu0.b32.end [16/16] 0.0, 128
    %v1749 = vpop.trf.xlu0
    %v1750 = vpop.trf.xlu0
    %v1751 = vpop.trf.xlu0
    %v1752 = vpop.trf.xlu0
    %v1753 = vpop.trf.xlu0
    %v1754 = vpop.trf.xlu0
    %v1755 = vpop.trf.xlu0
    %v1756 = vpop.trf.xlu0
    %v1757 = vpop.trf.xlu0
    %v1758 = vpop.trf.xlu0
    %v1759 = vpop.trf.xlu0
    %v1760 = vpop.trf.xlu0
    %v1761 = vpop.trf.xlu0
    %v1762 = vpop.trf.xlu0
    %v1763 = vpop.trf.xlu0
    %v1764 = vpop.trf.xlu0
    %1765 = vxpose.xlu0.b32.start [1/16] %v1726, 128
    %1766 = vxpose.xlu0.b32.cont [2/16] %v1728, 128
    %1767 = vxpose.xlu0.b32.cont [3/16] %v1730, 128
    %1768 = vxpose.xlu0.b32.cont [4/16] %v1732, 128
    %1769 = vxpose.xlu0.b32.cont [5/16] 0.0, 128
    %1770 = vxpose.xlu0.b32.cont [6/16] 0.0, 128
    %1771 = vxpose.xlu0.b32.cont [7/16] 0.0, 128
    %1772 = vxpose.xlu0.b32.cont [8/16] 0.0, 128
    %1773 = vxpose.xlu0.b32.cont [9/16] 0.0, 128
    %1774 = vxpose.xlu0.b32.cont [10/16] 0.0, 128
    %1775 = vxpose.xlu0.b32.cont [11/16] 0.0, 128
    %1776 = vxpose.xlu0.b32.cont [12/16] 0.0, 128
    %1777 = vxpose.xlu0.b32.cont [13/16] 0.0, 128
    %1778 = vxpose.xlu0.b32.cont [14/16] 0.0, 128
    %1779 = vxpose.xlu0.b32.cont [15/16] 0.0, 128
    %1780 = vxpose.xlu0.b32.end [16/16] 0.0, 128
    %v1781 = vpop.trf.xlu0
    %v1782 = vpop.trf.xlu0
    %v1783 = vpop.trf.xlu0
    %v1784 = vpop.trf.xlu0
    %v1785 = vpop.trf.xlu0
    %v1786 = vpop.trf.xlu0
    %v1787 = vpop.trf.xlu0
    %v1788 = vpop.trf.xlu0
    %v1789 = vpop.trf.xlu0
    %v1790 = vpop.trf.xlu0
    %v1791 = vpop.trf.xlu0
    %v1792 = vpop.trf.xlu0
    %v1793 = vpop.trf.xlu0
    %v1794 = vpop.trf.xlu0
    %v1795 = vpop.trf.xlu0
    %v1796 = vpop.trf.xlu0
    %s1797 = scalar_lea.vmem %s11, 256
    %1798 = vst.msk [vmem:[%s1797] sm:$0xff] %vm325, %v1749
    %1799 = vst.msk [vmem:[%s1797 + $0x8] sm:$0xff] %vm325, %v1750
    %1800 = vst.msk [vmem:[%s1797 + $0x10] sm:$0xff] %vm325, %v1751
    %1801 = vst.msk [vmem:[%s1797 + $0x18] sm:$0xff] %vm325, %v1752
    %1802 = vst.msk [vmem:[%s1797 + $0x20] sm:$0xff] %vm325, %v1753
    %1803 = vst.msk [vmem:[%s1797 + $0x28] sm:$0xff] %vm325, %v1754
    %1804 = vst.msk [vmem:[%s1797 + $0x30] sm:$0xff] %vm325, %v1755
    %1805 = vst.msk [vmem:[%s1797 + $0x38] sm:$0xff] %vm325, %v1756
    %1806 = vst.msk [vmem:[%s1797 + $0x40] sm:$0xff] %vm325, %v1757
    %1807 = vst.msk [vmem:[%s1797 + $0x48] sm:$0xff] %vm325, %v1758
    %1808 = vst.msk [vmem:[%s1797 + $0x50] sm:$0xff] %vm325, %v1759
    %1809 = vst.msk [vmem:[%s1797 + $0x58] sm:$0xff] %vm325, %v1760
    %1810 = vst.msk [vmem:[%s1797 + $0x60] sm:$0xff] %vm325, %v1761
    %1811 = vst.msk [vmem:[%s1797 + $0x68] sm:$0xff] %vm325, %v1762
    %1812 = vst.msk [vmem:[%s1797 + $0x70] sm:$0xff] %vm325, %v1763
    %1813 = vst.msk [vmem:[%s1797 + $0x78] sm:$0xff] %vm325, %v1764
    %1814 = vst.msk [vmem:[%s1797 + $0x80] sm:$0xff] %vm325, %v1781
    %1815 = vst.msk [vmem:[%s1797 + $0x88] sm:$0xff] %vm325, %v1782
    %1816 = vst.msk [vmem:[%s1797 + $0x90] sm:$0xff] %vm325, %v1783
    %1817 = vst.msk [vmem:[%s1797 + $0x98] sm:$0xff] %vm325, %v1784
    %1818 = vst.msk [vmem:[%s1797 + $0xa0] sm:$0xff] %vm325, %v1785
    %1819 = vst.msk [vmem:[%s1797 + $0xa8] sm:$0xff] %vm325, %v1786
    %1820 = vst.msk [vmem:[%s1797 + $0xb0] sm:$0xff] %vm325, %v1787
    %1821 = vst.msk [vmem:[%s1797 + $0xb8] sm:$0xff] %vm325, %v1788
    %1822 = vst.msk [vmem:[%s1797 + $0xc0] sm:$0xff] %vm325, %v1789
    %1823 = vst.msk [vmem:[%s1797 + $0xc8] sm:$0xff] %vm325, %v1790
    %1824 = vst.msk [vmem:[%s1797 + $0xd0] sm:$0xff] %vm325, %v1791
    %1825 = vst.msk [vmem:[%s1797 + $0xd8] sm:$0xff] %vm325, %v1792
    %1826 = vst.msk [vmem:[%s1797 + $0xe0] sm:$0xff] %vm325, %v1793
    %1827 = vst.msk [vmem:[%s1797 + $0xe8] sm:$0xff] %vm325, %v1794
    %1828 = vst.msk [vmem:[%s1797 + $0xf0] sm:$0xff] %vm325, %v1795
    %1829 = vst.msk [vmem:[%s1797 + $0xf8] sm:$0xff] %vm325, %v1796
    // Predicated region
    $region50: #{tpu_custom_call.1} parent=1 // pred_check
      _
    $region51: #{tpu_custom_call.1} parent=1 // pred_check_branch
      %1831 = sbr.rel (0) target = $region53
    $region52: #{tpu_custom_call.1} parent=1 // pred_region
      _
    $region53: #{tpu_custom_call.1} parent=1 // pred_fallthru
      _
    // Predicated region
    $region54: #{tpu_custom_call.1} parent=1 // pred_check
      _
    $region55: #{tpu_custom_call.1} parent=1 // pred_check_branch
      %1833 = sbr.rel (0) target = $region57
    $region56: #{tpu_custom_call.1} parent=1 // pred_region
      _
    $region57: #{tpu_custom_call.1} parent=1 // pred_fallthru
      _
    %1834 = vsyncpa [#allocation3], 1

</llo_original>
